<compile_context>
chip_gen: v7x
topology: tpu7x:2x2x1
jax: 0.10.0
libtpu: 0.0.40
codegen_flags: <defaults>
</compile_context>

<pallas_src>
import functools

import jax
import jax.numpy as jnp
from jax.experimental import pallas as pl
from jax.experimental.pallas import tpu as pltpu


def _block_kernel(x_ref, wc_ref, vecs_ref, mask_ref, wsse_ref, out_ref, *,
                  H, W, dot_dtype=jnp.float32):
    """One batch sample per grid step; in-kernel layout (C, H*W), lanes = spatial."""
    HW = H * W
    x2 = x_ref[...]                                       # (C, HW) f32

    # Folded conv (1x1 + 3x3 + both BNs): 9 accumulating per-tap dots.
    # Center tap first (no roll, no mask).
    acc = jnp.dot(wc_ref[4].astype(dot_dtype), x2.astype(dot_dtype),
                  preferred_element_type=jnp.float32)     # (C, HW)
    for tap in range(9):
        if tap == 4:
            continue
        ky, kx = tap // 3, tap % 3
        off = (ky - 1) * W + (kx - 1)
        # want t[p] = x2[p + off]  (roll convention: shift = -off)
        t = pltpu.roll(x2, shift=(-off) % HW, axis=1)     # XLU
        t = t * mask_ref[tap]                             # (1, HW) precomputed 0/1 mask
        acc = acc + jnp.dot(wc_ref[tap].astype(dot_dtype), t.astype(dot_dtype),
                            preferred_element_type=jnp.float32)

    shift = vecs_ref[:, 0:1]                              # folded conv bias + BN shift
    s1    = vecs_ref[:, 1:2]                              # bn1 scale
    t1    = vecs_ref[:, 2:3]                              # bn1 shift
    bsse  = vecs_ref[:, 3:4]                              # sse conv bias

    out = acc + shift                                     # (C, HW)

    # bn1 + sse gate branch
    bn_x = x2 * s1 + t1                                   # (C, HW)
    pooled = jnp.sum(bn_x, axis=1, keepdims=True) * (1.0 / HW)   # (C, 1) XLU reduce
    gate = jax.nn.sigmoid(
        jnp.dot(wsse_ref[...], pooled, preferred_element_type=jnp.float32)
        + bsse)                                           # (C, 1)
    out = out + bn_x * gate

    out_ref[...] = out.astype(out_ref.dtype)


def block_forward(x_nchw, kparams, *, dot_dtype=jnp.float32):
    """x_nchw: (N, C, H, W) float32. Returns (N, C, H, W)."""
    wc, vecs, masks, wsse = kparams
    N, C, H, W = x_nchw.shape
    HW = H * W
    x_flat = x_nchw.reshape(N, C, HW)                     # free reshape, no copy

    kern = functools.partial(_block_kernel, H=H, W=W, dot_dtype=dot_dtype)

    # Explicit VMEM budget: double-buffered x/out blocks + (double-buffered)
    # parameters + headroom for the per-tap working set; capped for v7x.
    f32 = 4
    act_bytes = C * HW * f32
    param_bytes = (9 * C * C + 4 * C + 9 * HW + C * C) * f32
    needed = 2 * 2 * act_bytes + 2 * param_bytes + 4 * act_bytes
    vmem_limit = int(min(max(8 * needed, 4 << 20), 48 << 20))

    out_flat = pl.pallas_call(
        kern,
        out_shape=jax.ShapeDtypeStruct((N, C, HW), x_nchw.dtype),
        grid_spec=pltpu.PrefetchScalarGridSpec(
            num_scalar_prefetch=0,
            grid=(N,),
            in_specs=[
                pl.BlockSpec((pl.Squeezed(), C, HW), lambda n: (n, 0, 0)),  # x
                pl.BlockSpec((9, C, C), lambda n: (0, 0, 0)),   # folded conv weights
                pl.BlockSpec((C, 4), lambda n: (0, 0)),          # merged per-channel vecs
                pl.BlockSpec((9, 1, HW), lambda n: (0, 0, 0)),   # precomputed tap masks
                pl.BlockSpec((C, C), lambda n: (0, 0)),          # sse weight
            ],
            out_specs=pl.BlockSpec((pl.Squeezed(), C, HW), lambda n: (n, 0, 0)),
        ),
        compiler_params=pltpu.CompilerParams(
            dimension_semantics=("parallel",),   # 2 TCs on v7x; harmless on v5e/v6e
            vmem_limit_bytes=vmem_limit),
    )(x_flat, wc, vecs, masks, wsse)

    return out_flat.reshape(N, C, H, W)


# ----------------------------- parameter glue -------------------------------

def make_raw_params(key, c):
    """Synthetic parameters in PyTorch layouts."""
    ks = jax.random.split(key, 18)

    def bn(kg, kb, km, kv):
        gamma = 1.0 + 0.1 * jax.random.normal(kg, (c,), jnp.float32)
        beta = 0.1 * jax.random.normal(kb, (c,), jnp.float32)
        mean = 0.1 * jax.random.normal(km, (c,), jnp.float32)
        var = 1.0 + 0.5 * jax.random.uniform(kv, (c,), jnp.float32)
        return gamma, beta, mean, var

    w21 = 0.2 * jax.random.normal(ks[0], (c, c, 1, 1), jnp.float32)
    b21 = 0.1 * jax.random.normal(ks[1], (c,), jnp.float32)
    bn21 = bn(ks[2], ks[3], ks[4], ks[5])
    w22 = 0.1 * jax.random.normal(ks[6], (c, c, 3, 3), jnp.float32)
    b22 = 0.1 * jax.random.normal(ks[7], (c,), jnp.float32)
    bn22 = bn(ks[8], ks[9], ks[10], ks[11])
    bn1 = bn(ks[12], ks[13], ks[14], ks[15])
    wsse = 0.2 * jax.random.normal(ks[16], (c, c, 1, 1), jnp.float32)
    bsse = 0.1 * jax.random.normal(ks[17], (c,), jnp.float32)
    return dict(w21=w21, b21=b21, bn21=bn21, w22=w22, b22=b22, bn22=bn22,
                bn1=bn1, wsse=wsse, bsse=bsse)


def _bn_fold(bn_params, eps=1e-5):
    gamma, beta, mean, var = bn_params
    scale = gamma * jax.lax.rsqrt(var + eps)
    shift = beta - mean * scale
    return scale, shift


def _make_tap_masks(H, W):
    """Precomputed boundary masks, one per 3x3 tap, shape (9, 1, H*W)."""
    HW = H * W
    lane = jnp.arange(HW, dtype=jnp.int32)
    h_idx = lane // W
    w_idx = lane % W
    masks = []
    for ky in range(3):
        for kx in range(3):
            dy, dx = ky - 1, kx - 1
            m = jnp.ones((HW,), jnp.bool_)
            if dy == -1:
                m = m & (h_idx >= 1)
            if dy == 1:
                m = m & (h_idx < H - 1)
            if dx == -1:
                m = m & (w_idx >= 1)
            if dx == 1:
                m = m & (w_idx < W - 1)
            masks.append(m.astype(jnp.float32))
    return jnp.stack(masks, axis=0).reshape(9, 1, HW)


def prepare_kernel_params(raw, H, W):
    """Fold BN into conv weights; merge 1x1 conv into the 3x3 center tap."""
    s21, t21 = _bn_fold(raw['bn21'])
    s22, t22 = _bn_fold(raw['bn22'])
    s1, t1 = _bn_fold(raw['bn1'])

    w21 = raw['w21'][:, :, 0, 0]                         # (Cout, Cin)
    w22 = raw['w22']                                     # (Cout, Cin, 3, 3)

    taps = []
    for ky in range(3):
        for kx in range(3):
            w = s22[:, None] * w22[:, :, ky, kx]
            if ky == 1 and kx == 1:
                w = w + s21[:, None] * w21               # fold 1x1 into center tap
            taps.append(w)
    wc = jnp.stack(taps, axis=0)                         # (9, Cout, Cin), tap-major

    shift = (raw['b21'] * s21 + t21) + (raw['b22'] * s22 + t22)
    vecs = jnp.stack([shift, s1, t1, raw['bsse']], axis=1)   # (C, 4)

    masks = _make_tap_masks(H, W)                        # (9, 1, H*W)
    wsse = raw['wsse'][:, :, 0, 0]                       # (Cout, Cin)
    return (wc, vecs, masks, wsse)


# ----------------------------- pure-JAX reference ---------------------------

def reference_forward(x, raw):
    """Independent NCHW reference using un-folded parameters."""
    N, C, H, W = x.shape
    s21, t21 = _bn_fold(raw['bn21'])
    s22, t22 = _bn_fold(raw['bn22'])
    s1, t1 = _bn_fold(raw['bn1'])

    w21 = raw['w21'][:, :, 0, 0]
    out21 = jnp.einsum('oi,nihw->nohw', w21, x) + raw['b21'][None, :, None, None]
    out21 = out21 * s21[None, :, None, None] + t21[None, :, None, None]

    xp = jnp.pad(x, ((0, 0), (0, 0), (1, 1), (1, 1)))
    out22 = jnp.zeros((N, C, H, W), jnp.float32)
    for ky in range(3):
        for kx in range(3):
            out22 = out22 + jnp.einsum('oi,nihw->nohw',
                                       raw['w22'][:, :, ky, kx],
                                       xp[:, :, ky:ky + H, kx:kx + W])
    out22 = out22 + raw['b22'][None, :, None, None]
    out22 = out22 * s22[None, :, None, None] + t22[None, :, None, None]

    bn_x = x * s1[None, :, None, None] + t1[None, :, None, None]
    pooled = jnp.mean(bn_x, axis=(2, 3))                 # (N, C)
    wsse = raw['wsse'][:, :, 0, 0]
    gate = jax.nn.sigmoid(jnp.einsum('oi,ni->no', wsse, pooled)
                          + raw['bsse'][None, :])
    out23 = bn_x * gate[:, :, None, None]

    return out21 + out22 + out23


if __name__ == "__main__":
    # The module's final add only broadcasts when in_channels == out_channels.
    N, C, H, W = 2, 8, 16, 16

    key = jax.random.PRNGKey(0)
    kx_, kp_ = jax.random.split(key)
    x = jax.random.normal(kx_, (N, C, H, W), jnp.float32)
    raw = make_raw_params(kp_, C)
    kparams = prepare_kernel_params(raw, H, W)

    out = block_forward(x, kparams)
    out = jax.block_until_ready(out)

    ref = reference_forward(x, raw)
    assert out.shape == (N, C, H, W)
    assert jnp.allclose(out, ref, rtol=1e-3, atol=1e-3), "mismatch vs reference"

    print("KERNEL_OK")
</pallas_src>

<mosaic_0001>
module attributes {stable_mosaic.version = 11 : i64} {
  func.func @_block_kernel(%arg0: i32, %arg1: memref<1x8x256xf32, #tpu.memory_space<vmem>>, %arg2: memref<9x8x8xf32, #tpu.memory_space<vmem>>, %arg3: memref<8x4xf32, #tpu.memory_space<vmem>>, %arg4: memref<9x1x256xf32, #tpu.memory_space<vmem>>, %arg5: memref<8x8xf32, #tpu.memory_space<vmem>>, %arg6: memref<1x8x256xf32, #tpu.memory_space<vmem>>) attributes {dimension_semantics = [#tpu.dimension_semantics<parallel>], iteration_bounds = array<i64: 2>, scalar_prefetch = 0 : i64, scratch_operands = 0 : i64, tpu.core_type = #tpu.core_type<tc>, window_params = [{transform_indices = @transform_0, window_bounds = array<i64: 1, 8, 256>}, {pipeline_mode = #tpu.pipeline_mode<synchronous>, transform_indices = @transform_1, window_bounds = array<i64: 9, 8, 8>}, {pipeline_mode = #tpu.pipeline_mode<synchronous>, transform_indices = @transform_2, window_bounds = array<i64: 8, 4>}, {pipeline_mode = #tpu.pipeline_mode<synchronous>, transform_indices = @transform_3, window_bounds = array<i64: 9, 1, 256>}, {pipeline_mode = #tpu.pipeline_mode<synchronous>, transform_indices = @transform_4, window_bounds = array<i64: 8, 8>}, {transform_indices = @transform_5, window_bounds = array<i64: 1, 8, 256>}]} {
    %c0 = arith.constant 0 : index
    %c0_0 = arith.constant 0 : index
    %c0_1 = arith.constant 0 : index
    %0 = vector.load %arg1[%c0, %c0_0, %c0_1] : memref<1x8x256xf32, #tpu.memory_space<vmem>>, vector<1x8x256xf32>
    %1 = vector.shape_cast %0 : vector<1x8x256xf32> to vector<8x256xf32>
    %c4 = arith.constant 4 : index
    %c0_2 = arith.constant 0 : index
    %c0_3 = arith.constant 0 : index
    %2 = vector.load %arg2[%c4, %c0_2, %c0_3] : memref<9x8x8xf32, #tpu.memory_space<vmem>>, vector<1x8x8xf32>
    %3 = vector.shape_cast %2 : vector<1x8x8xf32> to vector<8x8xf32>
    %cst = arith.constant dense<0.000000e+00> : vector<8x256xf32>
    %4 = tpu.matmul %3, %1, %cst {dimension_numbers = #tpu.dot_dimension_numbers<[1], [0], [0], [1], [0, 0, 1, 1], [], []>} : vector<8x8xf32>, vector<8x256xf32>, vector<8x256xf32> -> vector<8x256xf32>
    %c17_i32 = arith.constant 17 : i32
    %5 = tpu.dynamic_rotate %1 by %c17_i32 dim 1 : vector<8x256xf32>, i32 -> vector<8x256xf32>
    %c0_4 = arith.constant 0 : index
    %c0_5 = arith.constant 0 : index
    %c0_6 = arith.constant 0 : index
    %6 = vector.load %arg4[%c0_4, %c0_5, %c0_6] : memref<9x1x256xf32, #tpu.memory_space<vmem>>, vector<1x1x256xf32>
    %7 = vector.shape_cast %6 : vector<1x1x256xf32> to vector<1x256xf32>
    %8 = vector.broadcast %7 : vector<1x256xf32> to vector<8x256xf32>
    %9 = arith.mulf %5, %8 : vector<8x256xf32>
    %c0_7 = arith.constant 0 : index
    %c0_8 = arith.constant 0 : index
    %c0_9 = arith.constant 0 : index
    %10 = vector.load %arg2[%c0_7, %c0_8, %c0_9] : memref<9x8x8xf32, #tpu.memory_space<vmem>>, vector<1x8x8xf32>
    %11 = vector.shape_cast %10 : vector<1x8x8xf32> to vector<8x8xf32>
    %cst_10 = arith.constant dense<0.000000e+00> : vector<8x256xf32>
    %12 = tpu.matmul %11, %9, %cst_10 {dimension_numbers = #tpu.dot_dimension_numbers<[1], [0], [0], [1], [0, 0, 1, 1], [], []>} : vector<8x8xf32>, vector<8x256xf32>, vector<8x256xf32> -> vector<8x256xf32>
    %13 = arith.addf %4, %12 : vector<8x256xf32>
    %c16_i32 = arith.constant 16 : i32
    %14 = tpu.dynamic_rotate %1 by %c16_i32 dim 1 : vector<8x256xf32>, i32 -> vector<8x256xf32>
    %c1 = arith.constant 1 : index
    %c0_11 = arith.constant 0 : index
    %c0_12 = arith.constant 0 : index
    %15 = vector.load %arg4[%c1, %c0_11, %c0_12] : memref<9x1x256xf32, #tpu.memory_space<vmem>>, vector<1x1x256xf32>
    %16 = vector.shape_cast %15 : vector<1x1x256xf32> to vector<1x256xf32>
    %17 = vector.broadcast %16 : vector<1x256xf32> to vector<8x256xf32>
    %18 = arith.mulf %14, %17 : vector<8x256xf32>
    %c1_13 = arith.constant 1 : index
    %c0_14 = arith.constant 0 : index
    %c0_15 = arith.constant 0 : index
    %19 = vector.load %arg2[%c1_13, %c0_14, %c0_15] : memref<9x8x8xf32, #tpu.memory_space<vmem>>, vector<1x8x8xf32>
    %20 = vector.shape_cast %19 : vector<1x8x8xf32> to vector<8x8xf32>
    %cst_16 = arith.constant dense<0.000000e+00> : vector<8x256xf32>
    %21 = tpu.matmul %20, %18, %cst_16 {dimension_numbers = #tpu.dot_dimension_numbers<[1], [0], [0], [1], [0, 0, 1, 1], [], []>} : vector<8x8xf32>, vector<8x256xf32>, vector<8x256xf32> -> vector<8x256xf32>
    %22 = arith.addf %13, %21 : vector<8x256xf32>
    %c15_i32 = arith.constant 15 : i32
    %23 = tpu.dynamic_rotate %1 by %c15_i32 dim 1 : vector<8x256xf32>, i32 -> vector<8x256xf32>
    %c2 = arith.constant 2 : index
    %c0_17 = arith.constant 0 : index
    %c0_18 = arith.constant 0 : index
    %24 = vector.load %arg4[%c2, %c0_17, %c0_18] : memref<9x1x256xf32, #tpu.memory_space<vmem>>, vector<1x1x256xf32>
    %25 = vector.shape_cast %24 : vector<1x1x256xf32> to vector<1x256xf32>
    %26 = vector.broadcast %25 : vector<1x256xf32> to vector<8x256xf32>
    %27 = arith.mulf %23, %26 : vector<8x256xf32>
    %c2_19 = arith.constant 2 : index
    %c0_20 = arith.constant 0 : index
    %c0_21 = arith.constant 0 : index
    %28 = vector.load %arg2[%c2_19, %c0_20, %c0_21] : memref<9x8x8xf32, #tpu.memory_space<vmem>>, vector<1x8x8xf32>
    %29 = vector.shape_cast %28 : vector<1x8x8xf32> to vector<8x8xf32>
    %cst_22 = arith.constant dense<0.000000e+00> : vector<8x256xf32>
    %30 = tpu.matmul %29, %27, %cst_22 {dimension_numbers = #tpu.dot_dimension_numbers<[1], [0], [0], [1], [0, 0, 1, 1], [], []>} : vector<8x8xf32>, vector<8x256xf32>, vector<8x256xf32> -> vector<8x256xf32>
    %31 = arith.addf %22, %30 : vector<8x256xf32>
    %c1_i32 = arith.constant 1 : i32
    %32 = tpu.dynamic_rotate %1 by %c1_i32 dim 1 : vector<8x256xf32>, i32 -> vector<8x256xf32>
    %c3 = arith.constant 3 : index
    %c0_23 = arith.constant 0 : index
    %c0_24 = arith.constant 0 : index
    %33 = vector.load %arg4[%c3, %c0_23, %c0_24] : memref<9x1x256xf32, #tpu.memory_space<vmem>>, vector<1x1x256xf32>
    %34 = vector.shape_cast %33 : vector<1x1x256xf32> to vector<1x256xf32>
    %35 = vector.broadcast %34 : vector<1x256xf32> to vector<8x256xf32>
    %36 = arith.mulf %32, %35 : vector<8x256xf32>
    %c3_25 = arith.constant 3 : index
    %c0_26 = arith.constant 0 : index
    %c0_27 = arith.constant 0 : index
    %37 = vector.load %arg2[%c3_25, %c0_26, %c0_27] : memref<9x8x8xf32, #tpu.memory_space<vmem>>, vector<1x8x8xf32>
    %38 = vector.shape_cast %37 : vector<1x8x8xf32> to vector<8x8xf32>
    %cst_28 = arith.constant dense<0.000000e+00> : vector<8x256xf32>
    %39 = tpu.matmul %38, %36, %cst_28 {dimension_numbers = #tpu.dot_dimension_numbers<[1], [0], [0], [1], [0, 0, 1, 1], [], []>} : vector<8x8xf32>, vector<8x256xf32>, vector<8x256xf32> -> vector<8x256xf32>
    %40 = arith.addf %31, %39 : vector<8x256xf32>
    %c255_i32 = arith.constant 255 : i32
    %41 = tpu.dynamic_rotate %1 by %c255_i32 dim 1 : vector<8x256xf32>, i32 -> vector<8x256xf32>
    %c5 = arith.constant 5 : index
    %c0_29 = arith.constant 0 : index
    %c0_30 = arith.constant 0 : index
    %42 = vector.load %arg4[%c5, %c0_29, %c0_30] : memref<9x1x256xf32, #tpu.memory_space<vmem>>, vector<1x1x256xf32>
    %43 = vector.shape_cast %42 : vector<1x1x256xf32> to vector<1x256xf32>
    %44 = vector.broadcast %43 : vector<1x256xf32> to vector<8x256xf32>
    %45 = arith.mulf %41, %44 : vector<8x256xf32>
    %c5_31 = arith.constant 5 : index
    %c0_32 = arith.constant 0 : index
    %c0_33 = arith.constant 0 : index
    %46 = vector.load %arg2[%c5_31, %c0_32, %c0_33] : memref<9x8x8xf32, #tpu.memory_space<vmem>>, vector<1x8x8xf32>
    %47 = vector.shape_cast %46 : vector<1x8x8xf32> to vector<8x8xf32>
    %cst_34 = arith.constant dense<0.000000e+00> : vector<8x256xf32>
    %48 = tpu.matmul %47, %45, %cst_34 {dimension_numbers = #tpu.dot_dimension_numbers<[1], [0], [0], [1], [0, 0, 1, 1], [], []>} : vector<8x8xf32>, vector<8x256xf32>, vector<8x256xf32> -> vector<8x256xf32>
    %49 = arith.addf %40, %48 : vector<8x256xf32>
    %c241_i32 = arith.constant 241 : i32
    %50 = tpu.dynamic_rotate %1 by %c241_i32 dim 1 : vector<8x256xf32>, i32 -> vector<8x256xf32>
    %c6 = arith.constant 6 : index
    %c0_35 = arith.constant 0 : index
    %c0_36 = arith.constant 0 : index
    %51 = vector.load %arg4[%c6, %c0_35, %c0_36] : memref<9x1x256xf32, #tpu.memory_space<vmem>>, vector<1x1x256xf32>
    %52 = vector.shape_cast %51 : vector<1x1x256xf32> to vector<1x256xf32>
    %53 = vector.broadcast %52 : vector<1x256xf32> to vector<8x256xf32>
    %54 = arith.mulf %50, %53 : vector<8x256xf32>
    %c6_37 = arith.constant 6 : index
    %c0_38 = arith.constant 0 : index
    %c0_39 = arith.constant 0 : index
    %55 = vector.load %arg2[%c6_37, %c0_38, %c0_39] : memref<9x8x8xf32, #tpu.memory_space<vmem>>, vector<1x8x8xf32>
    %56 = vector.shape_cast %55 : vector<1x8x8xf32> to vector<8x8xf32>
    %cst_40 = arith.constant dense<0.000000e+00> : vector<8x256xf32>
    %57 = tpu.matmul %56, %54, %cst_40 {dimension_numbers = #tpu.dot_dimension_numbers<[1], [0], [0], [1], [0, 0, 1, 1], [], []>} : vector<8x8xf32>, vector<8x256xf32>, vector<8x256xf32> -> vector<8x256xf32>
    %58 = arith.addf %49, %57 : vector<8x256xf32>
    %c240_i32 = arith.constant 240 : i32
    %59 = tpu.dynamic_rotate %1 by %c240_i32 dim 1 : vector<8x256xf32>, i32 -> vector<8x256xf32>
    %c7 = arith.constant 7 : index
    %c0_41 = arith.constant 0 : index
    %c0_42 = arith.constant 0 : index
    %60 = vector.load %arg4[%c7, %c0_41, %c0_42] : memref<9x1x256xf32, #tpu.memory_space<vmem>>, vector<1x1x256xf32>
    %61 = vector.shape_cast %60 : vector<1x1x256xf32> to vector<1x256xf32>
    %62 = vector.broadcast %61 : vector<1x256xf32> to vector<8x256xf32>
    %63 = arith.mulf %59, %62 : vector<8x256xf32>
    %c7_43 = arith.constant 7 : index
    %c0_44 = arith.constant 0 : index
    %c0_45 = arith.constant 0 : index
    %64 = vector.load %arg2[%c7_43, %c0_44, %c0_45] : memref<9x8x8xf32, #tpu.memory_space<vmem>>, vector<1x8x8xf32>
    %65 = vector.shape_cast %64 : vector<1x8x8xf32> to vector<8x8xf32>
    %cst_46 = arith.constant dense<0.000000e+00> : vector<8x256xf32>
    %66 = tpu.matmul %65, %63, %cst_46 {dimension_numbers = #tpu.dot_dimension_numbers<[1], [0], [0], [1], [0, 0, 1, 1], [], []>} : vector<8x8xf32>, vector<8x256xf32>, vector<8x256xf32> -> vector<8x256xf32>
    %67 = arith.addf %58, %66 : vector<8x256xf32>
    %c239_i32 = arith.constant 239 : i32
    %68 = tpu.dynamic_rotate %1 by %c239_i32 dim 1 : vector<8x256xf32>, i32 -> vector<8x256xf32>
    %c8 = arith.constant 8 : index
    %c0_47 = arith.constant 0 : index
    %c0_48 = arith.constant 0 : index
    %69 = vector.load %arg4[%c8, %c0_47, %c0_48] : memref<9x1x256xf32, #tpu.memory_space<vmem>>, vector<1x1x256xf32>
    %70 = vector.shape_cast %69 : vector<1x1x256xf32> to vector<1x256xf32>
    %71 = vector.broadcast %70 : vector<1x256xf32> to vector<8x256xf32>
    %72 = arith.mulf %68, %71 : vector<8x256xf32>
    %c8_49 = arith.constant 8 : index
    %c0_50 = arith.constant 0 : index
    %c0_51 = arith.constant 0 : index
    %73 = vector.load %arg2[%c8_49, %c0_50, %c0_51] : memref<9x8x8xf32, #tpu.memory_space<vmem>>, vector<1x8x8xf32>
    %74 = vector.shape_cast %73 : vector<1x8x8xf32> to vector<8x8xf32>
    %cst_52 = arith.constant dense<0.000000e+00> : vector<8x256xf32>
    %75 = tpu.matmul %74, %72, %cst_52 {dimension_numbers = #tpu.dot_dimension_numbers<[1], [0], [0], [1], [0, 0, 1, 1], [], []>} : vector<8x8xf32>, vector<8x256xf32>, vector<8x256xf32> -> vector<8x256xf32>
    %76 = arith.addf %67, %75 : vector<8x256xf32>
    %c0_53 = arith.constant 0 : index
    %c0_54 = arith.constant 0 : index
    %77 = vector.load %arg3[%c0_53, %c0_54] : memref<8x4xf32, #tpu.memory_space<vmem>>, vector<8x1xf32>
    %c0_55 = arith.constant 0 : index
    %c1_56 = arith.constant 1 : index
    %78 = vector.load %arg3[%c0_55, %c1_56] : memref<8x4xf32, #tpu.memory_space<vmem>>, vector<8x1xf32>
    %c0_57 = arith.constant 0 : index
    %c2_58 = arith.constant 2 : index
    %79 = vector.load %arg3[%c0_57, %c2_58] : memref<8x4xf32, #tpu.memory_space<vmem>>, vector<8x1xf32>
    %c0_59 = arith.constant 0 : index
    %c3_60 = arith.constant 3 : index
    %80 = vector.load %arg3[%c0_59, %c3_60] : memref<8x4xf32, #tpu.memory_space<vmem>>, vector<8x1xf32>
    %81 = vector.broadcast %77 : vector<8x1xf32> to vector<8x256xf32>
    %82 = arith.addf %76, %81 : vector<8x256xf32>
    %83 = vector.broadcast %78 : vector<8x1xf32> to vector<8x256xf32>
    %84 = arith.mulf %1, %83 : vector<8x256xf32>
    %85 = vector.broadcast %79 : vector<8x1xf32> to vector<8x256xf32>
    %86 = arith.addf %84, %85 : vector<8x256xf32>
    %cst_61 = arith.constant dense<0.000000e+00> : vector<8xf32>
    %87 = vector.multi_reduction <add>, %86, %cst_61 [1] : vector<8x256xf32> to vector<8xf32>
    %88 = vector.shape_cast %87 : vector<8xf32> to vector<8x1xf32>
    %cst_62 = arith.constant 3.906250e-03 : f32
    %89 = vector.broadcast %cst_62 : f32 to vector<8x1xf32>
    %90 = arith.mulf %88, %89 : vector<8x1xf32>
    %c0_63 = arith.constant 0 : index
    %c0_64 = arith.constant 0 : index
    %91 = vector.load %arg5[%c0_63, %c0_64] : memref<8x8xf32, #tpu.memory_space<vmem>>, vector<8x8xf32>
    %cst_65 = arith.constant dense<0.000000e+00> : vector<8x1xf32>
    %92 = tpu.matmul %91, %90, %cst_65 {dimension_numbers = #tpu.dot_dimension_numbers<[1], [0], [0], [1], [0, 0, 1, 1], [], []>} : vector<8x8xf32>, vector<8x1xf32>, vector<8x1xf32> -> vector<8x1xf32>
    %93 = arith.addf %92, %80 : vector<8x1xf32>
    %94 = arith.negf %93 : vector<8x1xf32>
    %95 = math.exp %94 : vector<8x1xf32>
    %cst_66 = arith.constant 1.000000e+00 : f32
    %96 = vector.broadcast %cst_66 : f32 to vector<8x1xf32>
    %97 = arith.addf %96, %95 : vector<8x1xf32>
    %98 = arith.divf %96, %97 : vector<8x1xf32>
    %99 = vector.broadcast %98 : vector<8x1xf32> to vector<8x256xf32>
    %100 = arith.mulf %86, %99 : vector<8x256xf32>
    %101 = arith.addf %82, %100 : vector<8x256xf32>
    %c0_67 = arith.constant 0 : index
    %c0_68 = arith.constant 0 : index
    %c0_69 = arith.constant 0 : index
    %102 = vector.load %arg6[%c0_67, %c0_68, %c0_69] : memref<1x8x256xf32, #tpu.memory_space<vmem>>, vector<1x8x256xf32>
    %103 = vector.shape_cast %102 : vector<1x8x256xf32> to vector<8x256xf32>
    %104 = vector.shape_cast %101 : vector<8x256xf32> to vector<1x8x256xf32>
    tpu.vector_store %arg6[%c0_67, %c0_68, %c0_69], %104 {strides = array<i32>} : memref<1x8x256xf32, #tpu.memory_space<vmem>>, vector<1x8x256xf32>,
    return
  }
  func.func @transform_0(%arg0: i32) -> (i32, i32, i32) {
    %c0_i32 = arith.constant 0 : i32
    %c0_i32_0 = arith.constant 0 : i32
    %c0_i32_1 = arith.constant 0 : i32
    return %arg0, %c0_i32, %c0_i32_0 : i32, i32, i32
  }
  func.func @transform_1(%arg0: i32) -> (i32, i32, i32) {
    %c0_i32 = arith.constant 0 : i32
    %c0_i32_0 = arith.constant 0 : i32
    %c0_i32_1 = arith.constant 0 : i32
    %c0_i32_2 = arith.constant 0 : i32
    return %c0_i32, %c0_i32_0, %c0_i32_1 : i32, i32, i32
  }
  func.func @transform_2(%arg0: i32) -> (i32, i32) {
    %c0_i32 = arith.constant 0 : i32
    %c0_i32_0 = arith.constant 0 : i32
    %c0_i32_1 = arith.constant 0 : i32
    return %c0_i32, %c0_i32_0 : i32, i32
  }
  func.func @transform_3(%arg0: i32) -> (i32, i32, i32) {
    %c0_i32 = arith.constant 0 : i32
    %c0_i32_0 = arith.constant 0 : i32
    %c0_i32_1 = arith.constant 0 : i32
    %c0_i32_2 = arith.constant 0 : i32
    return %c0_i32, %c0_i32_0, %c0_i32_1 : i32, i32, i32
  }
  func.func @transform_4(%arg0: i32) -> (i32, i32) {
    %c0_i32 = arith.constant 0 : i32
    %c0_i32_0 = arith.constant 0 : i32
    %c0_i32_1 = arith.constant 0 : i32
    return %c0_i32, %c0_i32_0 : i32, i32
  }
  func.func @transform_5(%arg0: i32) -> (i32, i32, i32) {
    %c0_i32 = arith.constant 0 : i32
    %c0_i32_0 = arith.constant 0 : i32
    %c0_i32_1 = arith.constant 0 : i32
    return %arg0, %c0_i32, %c0_i32_0 : i32, i32, i32
  }
}

</mosaic_0001>

<llo_original>
// kernel: tpu_custom_call.1
$region0: #{tpu_custom_call.1}
  #allocation0 [shape = 'u32[]', space=smem, size = 0x4, offset = 0x4, fixed_abs, tag = 'smem constant byte address 0x4 - core index']
  #allocation1 [shape = 'u32[144,128]{1,0:T(1,128)}', space=vmem, size = 0x12000, scoped, tag = 'internal scratch']
  %s0 = inlined_call_operand.vmem [shape: f32[2,8,256], index: 0, kind: input, shape index: {}]
  %s1 = inlined_call_operand.vmem [shape: f32[9,8,8], index: 1, kind: input, shape index: {}]
  %s2 = inlined_call_operand.vmem [shape: f32[8,4], index: 2, kind: input, shape index: {}]
  %s3 = inlined_call_operand.vmem [shape: f32[9,1,256], index: 3, kind: input, shape index: {}]
  %s4 = inlined_call_operand.vmem [shape: f32[8,8], index: 4, kind: input, shape index: {}]
  %s5 = inlined_call_operand.hbm [shape: f32[2,8,256], index: 5, kind: output, shape index: {}]
  %s6 = sld [smem:[#allocation0]]
  $region53: #{tpu_custom_call.1} parent=0
    _
  %s8 = ssub.s32 1, %s6
  %s9 = scalar_select 0, %s8, %s6
  $region1: #{tpu_custom_call.1} parent=0
    #allocation2 [shape = 'u8[16384]{0}', space=vmem, size = 0x4000, scoped, tag = 'output window, operand 0']
    #allocation3 [shape = 's32[2]{0}', space=sflag, size = 0x8, scoped, tag = 'scoped memory for tpu_custom_call.1']
    %10 = vsyncpa [#allocation3], 0
    %s11 = scalar_lea.sflag [#allocation3], 1
    %12 = vsyncpa %s11, 0
    loop: start=0, step=1, limit=4
    $region2: #{tpu_custom_call.1} parent=1 // loop_pre_header
      _
    $region3: #{tpu_custom_call.1} parent=1 // loop_header
      %s14 = sphi 0, %s18
      %p15 = scmp.ge.s32.totalorder %s14, 4
      %s24 = sphi 0, %s26
      %s27 = sphi 0, %s24
      %s28 = sphi 0, %s27
      %s44 = sphi 0, %s28
      %s48 = sphi 0, %s48
      %s50 = sphi 0, %s48
      %s51 = sphi 0, %s50
      %s65 = sphi 0, %s51
      %s69 = sphi 0, %s69
      %s71 = sphi 0, %s69
      %s72 = sphi 0, %s71
      %s86 = sphi 0, %s72
      %s90 = sphi 0, %s90
      %s92 = sphi 0, %s90
      %s93 = sphi 0, %s92
      %s107 = sphi 0, %s93
      %s111 = sphi 0, %s111
      %s113 = sphi 0, %s111
      %s114 = sphi 0, %s113
      %s128 = sphi 0, %s114
      %s134 = sphi 0, %s136
      %s137 = sphi 0, %s134
      %s138 = sphi 0, %s137
      %s154 = sphi 0, %s138
    $region4: #{tpu_custom_call.1} parent=1 // loop_header_branch
      %17 = sbr.rel (%p15) target = $region8
    $region5: #{tpu_custom_call.1} parent=1 // loop_body
      %s19 = ssub.s32 %s14, 1
      %s20 = ssub.s32 %s14, 2
      %s21 = sadd.s32 %s14, 1
      %s22 = ssub.s32 %s14, %s21
      %p23 = scmp.eq.s32.totalorder %s22, 0
      %s25 = sadd.s32 %s24, 1
      %s26 = scalar_select %p23, %s24, %s25
      %p29 = pneg %p23
      %p30 = scmp.eq.s32.totalorder %s14, 1
      %p31 = por %p29, %p30
      %p32 = scmp.ne.s32.totalorder %s24, %s27
      %p33 = scmp.eq.s32.totalorder %s14, 0
      %p34 = por %p32, %p33
      %p35 = scmp.ne.s32.totalorder %s24, %s27
      %p36 = scmp.eq.s32.totalorder %s19, 1
      %p37 = por %p35, %p36
      %p38 = scmp.ne.s32.totalorder %s27, %s28
      %p39 = scmp.eq.s32.totalorder %s19, 0
      %p40 = por %p38, %p39
      %p41 = scmp.ne.s32.totalorder %s27, %s28
      %p42 = scmp.eq.s32.totalorder %s20, 1
      %p43 = por %p41, %p42
      %p45 = scmp.ne.s32.totalorder %s28, %s44
      %p46 = scmp.eq.s32.totalorder %s20, 0
      %p47 = por %p45, %p46
      %s49 = sadd.s32 %s48, 1
      %p52 = scmp.eq.s32.totalorder %s14, 1
      %p53 = scmp.ne.s32.totalorder %s48, %s50
      %p54 = scmp.eq.s32.totalorder %s14, 0
      %p55 = por %p53, %p54
      %p56 = scmp.ne.s32.totalorder %s48, %s50
      %p57 = scmp.eq.s32.totalorder %s19, 1
      %p58 = por %p56, %p57
      %p59 = scmp.ne.s32.totalorder %s50, %s51
      %p60 = scmp.eq.s32.totalorder %s19, 0
      %p61 = por %p59, %p60
      %p62 = scmp.ne.s32.totalorder %s50, %s51
      %p63 = scmp.eq.s32.totalorder %s20, 1
      %p64 = por %p62, %p63
      %p66 = scmp.ne.s32.totalorder %s51, %s65
      %p67 = scmp.eq.s32.totalorder %s20, 0
      %p68 = por %p66, %p67
      %s70 = sadd.s32 %s69, 1
      %p73 = scmp.eq.s32.totalorder %s14, 1
      %p74 = scmp.ne.s32.totalorder %s69, %s71
      %p75 = scmp.eq.s32.totalorder %s14, 0
      %p76 = por %p74, %p75
      %p77 = scmp.ne.s32.totalorder %s69, %s71
      %p78 = scmp.eq.s32.totalorder %s19, 1
      %p79 = por %p77, %p78
      %p80 = scmp.ne.s32.totalorder %s71, %s72
      %p81 = scmp.eq.s32.totalorder %s19, 0
      %p82 = por %p80, %p81
      %p83 = scmp.ne.s32.totalorder %s71, %s72
      %p84 = scmp.eq.s32.totalorder %s20, 1
      %p85 = por %p83, %p84
      %p87 = scmp.ne.s32.totalorder %s72, %s86
      %p88 = scmp.eq.s32.totalorder %s20, 0
      %p89 = por %p87, %p88
      %s91 = sadd.s32 %s90, 1
      %p94 = scmp.eq.s32.totalorder %s14, 1
      %p95 = scmp.ne.s32.totalorder %s90, %s92
      %p96 = scmp.eq.s32.totalorder %s14, 0
      %p97 = por %p95, %p96
      %p98 = scmp.ne.s32.totalorder %s90, %s92
      %p99 = scmp.eq.s32.totalorder %s19, 1
      %p100 = por %p98, %p99
      %p101 = scmp.ne.s32.totalorder %s92, %s93
      %p102 = scmp.eq.s32.totalorder %s19, 0
      %p103 = por %p101, %p102
      %p104 = scmp.ne.s32.totalorder %s92, %s93
      %p105 = scmp.eq.s32.totalorder %s20, 1
      %p106 = por %p104, %p105
      %p108 = scmp.ne.s32.totalorder %s93, %s107
      %p109 = scmp.eq.s32.totalorder %s20, 0
      %p110 = por %p108, %p109
      %s112 = sadd.s32 %s111, 1
      %p115 = scmp.eq.s32.totalorder %s14, 1
      %p116 = scmp.ne.s32.totalorder %s111, %s113
      %p117 = scmp.eq.s32.totalorder %s14, 0
      %p118 = por %p116, %p117
      %p119 = scmp.ne.s32.totalorder %s111, %s113
      %p120 = scmp.eq.s32.totalorder %s19, 1
      %p121 = por %p119, %p120
      %p122 = scmp.ne.s32.totalorder %s113, %s114
      %p123 = scmp.eq.s32.totalorder %s19, 0
      %p124 = por %p122, %p123
      %p125 = scmp.ne.s32.totalorder %s113, %s114
      %p126 = scmp.eq.s32.totalorder %s20, 1
      %p127 = por %p125, %p126
      %p129 = scmp.ne.s32.totalorder %s114, %s128
      %p130 = scmp.eq.s32.totalorder %s20, 0
      %p131 = por %p129, %p130
      %s132 = ssub.s32 %s14, %s21
      %p133 = scmp.eq.s32.totalorder %s132, 0
      %s135 = sadd.s32 %s134, 1
      %s136 = scalar_select %p133, %s134, %s135
      %p139 = pneg %p133
      %p140 = scmp.eq.s32.totalorder %s14, 1
      %p141 = por %p139, %p140
      %p142 = scmp.ne.s32.totalorder %s134, %s137
      %p143 = scmp.eq.s32.totalorder %s14, 0
      %p144 = por %p142, %p143
      %p145 = scmp.ne.s32.totalorder %s134, %s137
      %p146 = scmp.eq.s32.totalorder %s19, 1
      %p147 = por %p145, %p146
      %p148 = scmp.ne.s32.totalorder %s137, %s138
      %p149 = scmp.eq.s32.totalorder %s19, 0
      %p150 = por %p148, %p149
      %p151 = scmp.ne.s32.totalorder %s137, %s138
      %p152 = scmp.eq.s32.totalorder %s20, 1
      %p153 = por %p151, %p152
      %p155 = scmp.ne.s32.totalorder %s138, %s154
      %p156 = scmp.eq.s32.totalorder %s20, 0
      %p157 = por %p155, %p156
      %p158 = scmp.le.s32.totalorder 1, %s14
      %p159 = scmp.lt.s32.totalorder %s14, 3
      %p160 = pnand %p158, %p159
      %p161 = pneg %p160
      // Predicated region
      $region9: #{tpu_custom_call.1} parent=5 // pred_check
        _
      $region10: #{tpu_custom_call.1} parent=5 // pred_check_branch
        %163 = sbr.rel (%p160) target = $region12
      $region11: #{tpu_custom_call.1} parent=5 // pred_region
        %s164 = ssub.s32 %s14, 1
        // Predicated region
        $region13: #{tpu_custom_call.1} parent=11 // pred_check
          %p165 = pneg %p61
        $region14: #{tpu_custom_call.1} parent=11 // pred_check_branch
          %167 = sbr.rel (%p165) target = $region16
        $region15: #{tpu_custom_call.1} parent=11 // pred_region
          _
        $region16: #{tpu_custom_call.1} parent=11 // pred_fallthru
          _
        // Predicated region
        $region17: #{tpu_custom_call.1} parent=11 // pred_check
          %p168 = pneg %p82
        $region18: #{tpu_custom_call.1} parent=11 // pred_check_branch
          %170 = sbr.rel (%p168) target = $region20
        $region19: #{tpu_custom_call.1} parent=11 // pred_region
          _
        $region20: #{tpu_custom_call.1} parent=11 // pred_fallthru
          _
        // Predicated region
        $region21: #{tpu_custom_call.1} parent=11 // pred_check
          %p171 = pneg %p103
        $region22: #{tpu_custom_call.1} parent=11 // pred_check_branch
          %173 = sbr.rel (%p171) target = $region24
        $region23: #{tpu_custom_call.1} parent=11 // pred_region
          _
        $region24: #{tpu_custom_call.1} parent=11 // pred_fallthru
          _
        // Predicated region
        $region25: #{tpu_custom_call.1} parent=11 // pred_check
          %p174 = pneg %p124
        $region26: #{tpu_custom_call.1} parent=11 // pred_check_branch
          %176 = sbr.rel (%p174) target = $region28
        $region27: #{tpu_custom_call.1} parent=11 // pred_region
          _
        $region28: #{tpu_custom_call.1} parent=11 // pred_fallthru
          _
      $region12: #{tpu_custom_call.1} parent=5 // pred_fallthru
        _
      %p177 = scmp.lt.s32.totalorder %s14, 2
      // Predicated region
      $region29: #{tpu_custom_call.1} parent=5 // pred_check
        %p178 = pneg %p177
      $region30: #{tpu_custom_call.1} parent=5 // pred_check_branch
        %180 = sbr.rel (%p178) target = $region32
      $region31: #{tpu_custom_call.1} parent=5 // pred_region
        // Predicated region
        $region33: #{tpu_custom_call.1} parent=31 // pred_check
          %p181 = pneg %p34
        $region34: #{tpu_custom_call.1} parent=31 // pred_check_branch
          %183 = sbr.rel (%p181) target = $region36
        $region35: #{tpu_custom_call.1} parent=31 // pred_region
          %p184 = scmp.lt.s32.totalorder %s14, 1
          %s185 = scalar_select %p184, %s14, 1
          %s186 = smul.addr %s185, 2
          %s187 = smul.addr %s186, 8
          %s188 = scalar_lea.vmem %s0, %s187
        $region36: #{tpu_custom_call.1} parent=31 // pred_fallthru
          _
      $region32: #{tpu_custom_call.1} parent=5 // pred_fallthru
        _
      %p189 = scmp.le.s32.totalorder 1, %s14
      %p190 = scmp.lt.s32.totalorder %s14, 3
      %p191 = pnand %p189, %p190
      %p192 = pneg %p191
      // Predicated region
      $region37: #{tpu_custom_call.1} parent=5 // pred_check
        _
      $region38: #{tpu_custom_call.1} parent=5 // pred_check_branch
        %194 = sbr.rel (%p191) target = $region40
      $region39: #{tpu_custom_call.1} parent=5 // pred_region
        %s195 = ssub.s32 %s14, 1
        %p196 = scmp.lt.s32.totalorder %s19, 1
        %s197 = scalar_select %p196, %s19, 1
        %s198 = smul.addr %s197, 2
        %s199 = smul.addr %s198, 8
        %s200 = scalar_lea.vmem %s0, %s199
        %p201 = pneg %p40
        %p202 = pneg %p37
        %p203 = pneg %p61
        %p204 = pneg %p58
        %p205 = pneg %p82
        %p206 = pneg %p79
        %p207 = pneg %p103
        %p208 = pneg %p100
        %p209 = pneg %p124
        %p210 = pneg %p121
        %p211 = pneg %p150
        %p212 = pneg %p147
        %s213 = sand.u32 %s137, 1
        %s214 = scalar_lea.sflag [#allocation3], %s213
        %s215 = sand.u32 %s137, 1
        %s216 = smul.addr %s215, 16
        %s217 = scalar_lea.vmem [#allocation2], %s216
        %p218 = scmp.lt.s32.totalorder %s19, 1
        %s219 = scalar_select %p218, %s19, 1
        %s220 = smul.addr %s219, 2
        %s221 = smul.addr %s220, 8
        %s222 = scalar_lea.vmem %s0, %s221
        %v223 = vld [vmem:[%s222] sm:$0xff]
        %v224 = vld [vmem:[%s222 + $0x8] sm:$0xff]
        %s225 = scalar_lea.vmem %s1, 32
        %v226 = vld [vmem:[%s225] sm:$0xff]
        %227 = vrot.lane.b32.xlu0 %v223, 17
        %v228 = vpop.permute.xlu0 %227
        %229 = vrot.lane.b32.xlu0 %v224, 17
        %v230 = vpop.permute.xlu0 %229
        %v231 = vlaneseq
        %v232 = vand.u32 %v231, 127
        %vm233 = vcmp.lt.s32.totalorder %v232, 17
        %v234 = vsel %vm233, %v228, %v230
        %v235 = vsel %vm233, %v230, %v228
        %v236 = vld [vmem:[%s3] sm:$0x3]
        %v238 = vlaneseq
        %v239 = vshrl.u32 %v238, 7
        %v240 = vsub.s32 0, %v239
        %v241 = vrot.slane %v236, %v240
        %v242 = vlaneseq
        %v243 = vshrl.u32 %v242, 7
        %v244 = vsub.s32 1, %v243
        %v245 = vrot.slane %v236, %v244
        %v248 = vmul.f32 %v235, %v241
        %v249 = vmul.f32 %v234, %v245
        %v250 = vld [vmem:[%s1] sm:$0xff]
        %vm251 = vcmask 64512
        %v253 = vsel %vm251, %v250, 0
        %255 = vmatprep.subr.mxu0 %v249
        %256 = vmatpush1.msra.mxu0 %v248
        %257 = vmatprep.subr.mxu0 0.0
        %258 = vmatpush1.msra.mxu0 0.0
        %259 = vmatprep.subr.mxu0 0.0
        %260 = vmatpush1.msra.mxu0 0.0
        %261 = vmatprep.subr.mxu0 0.0
        %262 = vmatpush1.msra.mxu0 0.0
        %263 = vmatprep.subr.mxu0 0.0
        %264 = vmatpush1.msra.mxu0 0.0
        %265 = vmatprep.subr.mxu0 0.0
        %266 = vmatpush1.msra.mxu0 0.0
        %267 = vmatprep.subr.mxu0 0.0
        %268 = vmatpush1.msra.mxu0 0.0
        %269 = vmatprep.subr.mxu0 0.0
        %270 = vmatpush1.msra.mxu0 0.0
        %271 = vmatprep.subr.mxu0 0.0
        %272 = vmatpush1.msra.mxu0 0.0
        %273 = vmatprep.subr.mxu0 0.0
        %274 = vmatpush1.msra.mxu0 0.0
        %275 = vmatprep.subr.mxu0 0.0
        %276 = vmatpush1.msra.mxu0 0.0
        %277 = vmatprep.subr.mxu0 0.0
        %278 = vmatpush1.msra.mxu0 0.0
        %279 = vmatprep.subr.mxu0 0.0
        %280 = vmatpush1.msra.mxu0 0.0
        %281 = vmatprep.subr.mxu0 0.0
        %282 = vmatpush1.msra.mxu0 0.0
        %283 = vmatprep.subr.mxu0 0.0
        %284 = vmatpush1.msra.mxu0 0.0
        %285 = vmatprep.subr.mxu0 0.0
        %286 = vmatpush1.msra.mxu0 0.0
        %287 = vmatprep.subr.mxu0 0.0
        %288 = vmatpush1.msra.mxu0 0.0
        %289 = vmatprep.subr.mxu0 0.0
        %290 = vmatpush1.msra.mxu0 0.0
        %291 = vmatprep.subr.mxu0 0.0
        %292 = vmatpush1.msra.mxu0 0.0
        %293 = vmatprep.subr.mxu0 0.0
        %294 = vmatpush1.msra.mxu0 0.0
        %295 = vmatprep.subr.mxu0 0.0
        %296 = vmatpush1.msra.mxu0 0.0
        %297 = vmatprep.subr.mxu0 0.0
        %298 = vmatpush1.msra.mxu0 0.0
        %299 = vmatprep.subr.mxu0 0.0
        %300 = vmatpush1.msra.mxu0 0.0
        %301 = vmatprep.subr.mxu0 0.0
        %302 = vmatpush1.msra.mxu0 0.0
        %303 = vmatprep.subr.mxu0 0.0
        %304 = vmatpush1.msra.mxu0 0.0
        %305 = vmatprep.subr.mxu0 0.0
        %306 = vmatpush1.msra.mxu0 0.0
        %307 = vmatprep.subr.mxu0 0.0
        %308 = vmatpush1.msra.mxu0 0.0
        %309 = vmatprep.subr.mxu0 0.0
        %310 = vmatpush1.msra.mxu0 0.0
        %311 = vmatprep.subr.mxu0 0.0
        %312 = vmatpush1.msra.mxu0 0.0
        %313 = vmatprep.subr.mxu0 0.0
        %314 = vmatpush1.msra.mxu0 0.0
        %315 = vmatprep.subr.mxu0 0.0
        %316 = vmatpush1.msra.mxu0 0.0
        %317 = vmatprep.subr.mxu0 0.0
        %318 = vmatpush1.msra.mxu0 0.0
        %319 = vmatprep.mubr.f32.mxu0 0.0
        %320 = vmatmul.mubr.f32.gmra.mrb[0].mxu0 %v253
        %v321 = vpop.f32.mrb[0].mxu0
        %v322 = vadd.f32 0.0, %v321
        %v323 = vpop.f32.mrb[0].mxu0
        %v324 = vadd.f32 0.0, %v323
        %325 = vdwg.mxu0
        %v327 = vsel %vm251, %v226, 0
        %329 = vmatprep.subr.mxu0 %v224
        %330 = vmatpush1.msra.mxu0 %v223
        %331 = vmatprep.subr.mxu0 0.0
        %332 = vmatpush1.msra.mxu0 0.0
        %333 = vmatprep.subr.mxu0 0.0
        %334 = vmatpush1.msra.mxu0 0.0
        %335 = vmatprep.subr.mxu0 0.0
        %336 = vmatpush1.msra.mxu0 0.0
        %337 = vmatprep.subr.mxu0 0.0
        %338 = vmatpush1.msra.mxu0 0.0
        %339 = vmatprep.subr.mxu0 0.0
        %340 = vmatpush1.msra.mxu0 0.0
        %341 = vmatprep.subr.mxu0 0.0
        %342 = vmatpush1.msra.mxu0 0.0
        %343 = vmatprep.subr.mxu0 0.0
        %344 = vmatpush1.msra.mxu0 0.0
        %345 = vmatprep.subr.mxu0 0.0
        %346 = vmatpush1.msra.mxu0 0.0
        %347 = vmatprep.subr.mxu0 0.0
        %348 = vmatpush1.msra.mxu0 0.0
        %349 = vmatprep.subr.mxu0 0.0
        %350 = vmatpush1.msra.mxu0 0.0
        %351 = vmatprep.subr.mxu0 0.0
        %352 = vmatpush1.msra.mxu0 0.0
        %353 = vmatprep.subr.mxu0 0.0
        %354 = vmatpush1.msra.mxu0 0.0
        %355 = vmatprep.subr.mxu0 0.0
        %356 = vmatpush1.msra.mxu0 0.0
        %357 = vmatprep.subr.mxu0 0.0
        %358 = vmatpush1.msra.mxu0 0.0
        %359 = vmatprep.subr.mxu0 0.0
        %360 = vmatpush1.msra.mxu0 0.0
        %361 = vmatprep.subr.mxu0 0.0
        %362 = vmatpush1.msra.mxu0 0.0
        %363 = vmatprep.subr.mxu0 0.0
        %364 = vmatpush1.msra.mxu0 0.0
        %365 = vmatprep.subr.mxu0 0.0
        %366 = vmatpush1.msra.mxu0 0.0
        %367 = vmatprep.subr.mxu0 0.0
        %368 = vmatpush1.msra.mxu0 0.0
        %369 = vmatprep.subr.mxu0 0.0
        %370 = vmatpush1.msra.mxu0 0.0
        %371 = vmatprep.subr.mxu0 0.0
        %372 = vmatpush1.msra.mxu0 0.0
        %373 = vmatprep.subr.mxu0 0.0
        %374 = vmatpush1.msra.mxu0 0.0
        %375 = vmatprep.subr.mxu0 0.0
        %376 = vmatpush1.msra.mxu0 0.0
        %377 = vmatprep.subr.mxu0 0.0
        %378 = vmatpush1.msra.mxu0 0.0
        %379 = vmatprep.subr.mxu0 0.0
        %380 = vmatpush1.msra.mxu0 0.0
        %381 = vmatprep.subr.mxu0 0.0
        %382 = vmatpush1.msra.mxu0 0.0
        %383 = vmatprep.subr.mxu0 0.0
        %384 = vmatpush1.msra.mxu0 0.0
        %385 = vmatprep.subr.mxu0 0.0
        %386 = vmatpush1.msra.mxu0 0.0
        %387 = vmatprep.subr.mxu0 0.0
        %388 = vmatpush1.msra.mxu0 0.0
        %389 = vmatprep.subr.mxu0 0.0
        %390 = vmatpush1.msra.mxu0 0.0
        %391 = vmatprep.subr.mxu0 0.0
        %392 = vmatpush1.msra.mxu0 0.0
        %393 = vmatprep.mubr.f32.mxu0 0.0
        %394 = vmatmul.mubr.f32.gmra.mrb[0].mxu0 %v327
        %v395 = vpop.f32.mrb[0].mxu0
        %v396 = vadd.f32 %v322, %v395
        %v397 = vpop.f32.mrb[0].mxu0
        %v398 = vadd.f32 %v324, %v397
        %399 = vdwg.mxu0
        %400 = vrot.lane.b32.xlu0 %v223, 16
        %v401 = vpop.permute.xlu0 %400
        %402 = vrot.lane.b32.xlu0 %v224, 16
        %v403 = vpop.permute.xlu0 %402
        %vm404 = vcmp.lt.s32.totalorder %v232, 16
        %v405 = vsel %vm404, %v401, %v403
        %v406 = vsel %vm404, %v403, %v401
        %s407 = scalar_lea.vmem %s3, 2
        %v408 = vld [vmem:[%s407] sm:$0x3]
        %v410 = vlaneseq
        %v411 = vshrl.u32 %v410, 7
        %v412 = vsub.s32 0, %v411
        %v413 = vrot.slane %v408, %v412
        %v414 = vlaneseq
        %v415 = vshrl.u32 %v414, 7
        %v416 = vsub.s32 1, %v415
        %v417 = vrot.slane %v408, %v416
        %v420 = vmul.f32 %v406, %v413
        %v421 = vmul.f32 %v405, %v417
        %s422 = scalar_lea.vmem %s1, 8
        %v423 = vld [vmem:[%s422] sm:$0xff]
        %v425 = vsel %vm251, %v423, 0
        %427 = vmatprep.subr.mxu0 %v421
        %428 = vmatpush1.msra.mxu0 %v420
        %429 = vmatprep.subr.mxu0 0.0
        %430 = vmatpush1.msra.mxu0 0.0
        %431 = vmatprep.subr.mxu0 0.0
        %432 = vmatpush1.msra.mxu0 0.0
        %433 = vmatprep.subr.mxu0 0.0
        %434 = vmatpush1.msra.mxu0 0.0
        %435 = vmatprep.subr.mxu0 0.0
        %436 = vmatpush1.msra.mxu0 0.0
        %437 = vmatprep.subr.mxu0 0.0
        %438 = vmatpush1.msra.mxu0 0.0
        %439 = vmatprep.subr.mxu0 0.0
        %440 = vmatpush1.msra.mxu0 0.0
        %441 = vmatprep.subr.mxu0 0.0
        %442 = vmatpush1.msra.mxu0 0.0
        %443 = vmatprep.subr.mxu0 0.0
        %444 = vmatpush1.msra.mxu0 0.0
        %445 = vmatprep.subr.mxu0 0.0
        %446 = vmatpush1.msra.mxu0 0.0
        %447 = vmatprep.subr.mxu0 0.0
        %448 = vmatpush1.msra.mxu0 0.0
        %449 = vmatprep.subr.mxu0 0.0
        %450 = vmatpush1.msra.mxu0 0.0
        %451 = vmatprep.subr.mxu0 0.0
        %452 = vmatpush1.msra.mxu0 0.0
        %453 = vmatprep.subr.mxu0 0.0
        %454 = vmatpush1.msra.mxu0 0.0
        %455 = vmatprep.subr.mxu0 0.0
        %456 = vmatpush1.msra.mxu0 0.0
        %457 = vmatprep.subr.mxu0 0.0
        %458 = vmatpush1.msra.mxu0 0.0
        %459 = vmatprep.subr.mxu0 0.0
        %460 = vmatpush1.msra.mxu0 0.0
        %461 = vmatprep.subr.mxu0 0.0
        %462 = vmatpush1.msra.mxu0 0.0
        %463 = vmatprep.subr.mxu0 0.0
        %464 = vmatpush1.msra.mxu0 0.0
        %465 = vmatprep.subr.mxu0 0.0
        %466 = vmatpush1.msra.mxu0 0.0
        %467 = vmatprep.subr.mxu0 0.0
        %468 = vmatpush1.msra.mxu0 0.0
        %469 = vmatprep.subr.mxu0 0.0
        %470 = vmatpush1.msra.mxu0 0.0
        %471 = vmatprep.subr.mxu0 0.0
        %472 = vmatpush1.msra.mxu0 0.0
        %473 = vmatprep.subr.mxu0 0.0
        %474 = vmatpush1.msra.mxu0 0.0
        %475 = vmatprep.subr.mxu0 0.0
        %476 = vmatpush1.msra.mxu0 0.0
        %477 = vmatprep.subr.mxu0 0.0
        %478 = vmatpush1.msra.mxu0 0.0
        %479 = vmatprep.subr.mxu0 0.0
        %480 = vmatpush1.msra.mxu0 0.0
        %481 = vmatprep.subr.mxu0 0.0
        %482 = vmatpush1.msra.mxu0 0.0
        %483 = vmatprep.subr.mxu0 0.0
        %484 = vmatpush1.msra.mxu0 0.0
        %485 = vmatprep.subr.mxu0 0.0
        %486 = vmatpush1.msra.mxu0 0.0
        %487 = vmatprep.subr.mxu0 0.0
        %488 = vmatpush1.msra.mxu0 0.0
        %489 = vmatprep.subr.mxu0 0.0
        %490 = vmatpush1.msra.mxu0 0.0
        %491 = vmatprep.mubr.f32.mxu0 0.0
        %492 = vmatmul.mubr.f32.gmra.mrb[0].mxu0 %v425
        %v493 = vpop.f32.mrb[0].mxu0
        %v494 = vadd.f32 0.0, %v493
        %v495 = vpop.f32.mrb[0].mxu0
        %v496 = vadd.f32 0.0, %v495
        %497 = vdwg.mxu0
        %v498 = vadd.f32 %v396, %v494
        %v499 = vadd.f32 %v398, %v496
        %500 = vrot.lane.b32.xlu0 %v223, 15
        %v501 = vpop.permute.xlu0 %500
        %502 = vrot.lane.b32.xlu0 %v224, 15
        %v503 = vpop.permute.xlu0 %502
        %vm504 = vcmp.lt.s32.totalorder %v232, 15
        %v505 = vsel %vm504, %v501, %v503
        %v506 = vsel %vm504, %v503, %v501
        %s507 = scalar_lea.vmem %s3, 4
        %v508 = vld [vmem:[%s507] sm:$0x3]
        %v510 = vlaneseq
        %v511 = vshrl.u32 %v510, 7
        %v512 = vsub.s32 0, %v511
        %v513 = vrot.slane %v508, %v512
        %v514 = vlaneseq
        %v515 = vshrl.u32 %v514, 7
        %v516 = vsub.s32 1, %v515
        %v517 = vrot.slane %v508, %v516
        %v520 = vmul.f32 %v506, %v513
        %v521 = vmul.f32 %v505, %v517
        %s522 = scalar_lea.vmem %s1, 16
        %v523 = vld [vmem:[%s522] sm:$0xff]
        %v525 = vsel %vm251, %v523, 0
        %527 = vmatprep.subr.mxu0 %v521
        %528 = vmatpush1.msra.mxu0 %v520
        %529 = vmatprep.subr.mxu0 0.0
        %530 = vmatpush1.msra.mxu0 0.0
        %531 = vmatprep.subr.mxu0 0.0
        %532 = vmatpush1.msra.mxu0 0.0
        %533 = vmatprep.subr.mxu0 0.0
        %534 = vmatpush1.msra.mxu0 0.0
        %535 = vmatprep.subr.mxu0 0.0
        %536 = vmatpush1.msra.mxu0 0.0
        %537 = vmatprep.subr.mxu0 0.0
        %538 = vmatpush1.msra.mxu0 0.0
        %539 = vmatprep.subr.mxu0 0.0
        %540 = vmatpush1.msra.mxu0 0.0
        %541 = vmatprep.subr.mxu0 0.0
        %542 = vmatpush1.msra.mxu0 0.0
        %543 = vmatprep.subr.mxu0 0.0
        %544 = vmatpush1.msra.mxu0 0.0
        %545 = vmatprep.subr.mxu0 0.0
        %546 = vmatpush1.msra.mxu0 0.0
        %547 = vmatprep.subr.mxu0 0.0
        %548 = vmatpush1.msra.mxu0 0.0
        %549 = vmatprep.subr.mxu0 0.0
        %550 = vmatpush1.msra.mxu0 0.0
        %551 = vmatprep.subr.mxu0 0.0
        %552 = vmatpush1.msra.mxu0 0.0
        %553 = vmatprep.subr.mxu0 0.0
        %554 = vmatpush1.msra.mxu0 0.0
        %555 = vmatprep.subr.mxu0 0.0
        %556 = vmatpush1.msra.mxu0 0.0
        %557 = vmatprep.subr.mxu0 0.0
        %558 = vmatpush1.msra.mxu0 0.0
        %559 = vmatprep.subr.mxu0 0.0
        %560 = vmatpush1.msra.mxu0 0.0
        %561 = vmatprep.subr.mxu0 0.0
        %562 = vmatpush1.msra.mxu0 0.0
        %563 = vmatprep.subr.mxu0 0.0
        %564 = vmatpush1.msra.mxu0 0.0
        %565 = vmatprep.subr.mxu0 0.0
        %566 = vmatpush1.msra.mxu0 0.0
        %567 = vmatprep.subr.mxu0 0.0
        %568 = vmatpush1.msra.mxu0 0.0
        %569 = vmatprep.subr.mxu0 0.0
        %570 = vmatpush1.msra.mxu0 0.0
        %571 = vmatprep.subr.mxu0 0.0
        %572 = vmatpush1.msra.mxu0 0.0
        %573 = vmatprep.subr.mxu0 0.0
        %574 = vmatpush1.msra.mxu0 0.0
        %575 = vmatprep.subr.mxu0 0.0
        %576 = vmatpush1.msra.mxu0 0.0
        %577 = vmatprep.subr.mxu0 0.0
        %578 = vmatpush1.msra.mxu0 0.0
        %579 = vmatprep.subr.mxu0 0.0
        %580 = vmatpush1.msra.mxu0 0.0
        %581 = vmatprep.subr.mxu0 0.0
        %582 = vmatpush1.msra.mxu0 0.0
        %583 = vmatprep.subr.mxu0 0.0
        %584 = vmatpush1.msra.mxu0 0.0
        %585 = vmatprep.subr.mxu0 0.0
        %586 = vmatpush1.msra.mxu0 0.0
        %587 = vmatprep.subr.mxu0 0.0
        %588 = vmatpush1.msra.mxu0 0.0
        %589 = vmatprep.subr.mxu0 0.0
        %590 = vmatpush1.msra.mxu0 0.0
        %591 = vmatprep.mubr.f32.mxu0 0.0
        %592 = vmatmul.mubr.f32.gmra.mrb[0].mxu0 %v525
        %v593 = vpop.f32.mrb[0].mxu0
        %v594 = vadd.f32 0.0, %v593
        %v595 = vpop.f32.mrb[0].mxu0
        %v596 = vadd.f32 0.0, %v595
        %597 = vdwg.mxu0
        %v598 = vadd.f32 %v498, %v594
        %v599 = vadd.f32 %v499, %v596
        %600 = vrot.lane.b32.xlu0 %v223, 1
        %v601 = vpop.permute.xlu0 %600
        %602 = vrot.lane.b32.xlu0 %v224, 1
        %v603 = vpop.permute.xlu0 %602
        %vm604 = vcmp.lt.s32.totalorder %v232, 1
        %v605 = vsel %vm604, %v601, %v603
        %v606 = vsel %vm604, %v603, %v601
        %s607 = scalar_lea.vmem %s3, 6
        %v608 = vld [vmem:[%s607] sm:$0x3]
        %v610 = vlaneseq
        %v611 = vshrl.u32 %v610, 7
        %v612 = vsub.s32 0, %v611
        %v613 = vrot.slane %v608, %v612
        %v614 = vlaneseq
        %v615 = vshrl.u32 %v614, 7
        %v616 = vsub.s32 1, %v615
        %v617 = vrot.slane %v608, %v616
        %v620 = vmul.f32 %v606, %v613
        %v621 = vmul.f32 %v605, %v617
        %s622 = scalar_lea.vmem %s1, 24
        %v623 = vld [vmem:[%s622] sm:$0xff]
        %v625 = vsel %vm251, %v623, 0
        %627 = vmatprep.subr.mxu0 %v621
        %628 = vmatpush1.msra.mxu0 %v620
        %629 = vmatprep.subr.mxu0 0.0
        %630 = vmatpush1.msra.mxu0 0.0
        %631 = vmatprep.subr.mxu0 0.0
        %632 = vmatpush1.msra.mxu0 0.0
        %633 = vmatprep.subr.mxu0 0.0
        %634 = vmatpush1.msra.mxu0 0.0
        %635 = vmatprep.subr.mxu0 0.0
        %636 = vmatpush1.msra.mxu0 0.0
        %637 = vmatprep.subr.mxu0 0.0
        %638 = vmatpush1.msra.mxu0 0.0
        %639 = vmatprep.subr.mxu0 0.0
        %640 = vmatpush1.msra.mxu0 0.0
        %641 = vmatprep.subr.mxu0 0.0
        %642 = vmatpush1.msra.mxu0 0.0
        %643 = vmatprep.subr.mxu0 0.0
        %644 = vmatpush1.msra.mxu0 0.0
        %645 = vmatprep.subr.mxu0 0.0
        %646 = vmatpush1.msra.mxu0 0.0
        %647 = vmatprep.subr.mxu0 0.0
        %648 = vmatpush1.msra.mxu0 0.0
        %649 = vmatprep.subr.mxu0 0.0
        %650 = vmatpush1.msra.mxu0 0.0
        %651 = vmatprep.subr.mxu0 0.0
        %652 = vmatpush1.msra.mxu0 0.0
        %653 = vmatprep.subr.mxu0 0.0
        %654 = vmatpush1.msra.mxu0 0.0
        %655 = vmatprep.subr.mxu0 0.0
        %656 = vmatpush1.msra.mxu0 0.0
        %657 = vmatprep.subr.mxu0 0.0
        %658 = vmatpush1.msra.mxu0 0.0
        %659 = vmatprep.subr.mxu0 0.0
        %660 = vmatpush1.msra.mxu0 0.0
        %661 = vmatprep.subr.mxu0 0.0
        %662 = vmatpush1.msra.mxu0 0.0
        %663 = vmatprep.subr.mxu0 0.0
        %664 = vmatpush1.msra.mxu0 0.0
        %665 = vmatprep.subr.mxu0 0.0
        %666 = vmatpush1.msra.mxu0 0.0
        %667 = vmatprep.subr.mxu0 0.0
        %668 = vmatpush1.msra.mxu0 0.0
        %669 = vmatprep.subr.mxu0 0.0
        %670 = vmatpush1.msra.mxu0 0.0
        %671 = vmatprep.subr.mxu0 0.0
        %672 = vmatpush1.msra.mxu0 0.0
        %673 = vmatprep.subr.mxu0 0.0
        %674 = vmatpush1.msra.mxu0 0.0
        %675 = vmatprep.subr.mxu0 0.0
        %676 = vmatpush1.msra.mxu0 0.0
        %677 = vmatprep.subr.mxu0 0.0
        %678 = vmatpush1.msra.mxu0 0.0
        %679 = vmatprep.subr.mxu0 0.0
        %680 = vmatpush1.msra.mxu0 0.0
        %681 = vmatprep.subr.mxu0 0.0
        %682 = vmatpush1.msra.mxu0 0.0
        %683 = vmatprep.subr.mxu0 0.0
        %684 = vmatpush1.msra.mxu0 0.0
        %685 = vmatprep.subr.mxu0 0.0
        %686 = vmatpush1.msra.mxu0 0.0
        %687 = vmatprep.subr.mxu0 0.0
        %688 = vmatpush1.msra.mxu0 0.0
        %689 = vmatprep.subr.mxu0 0.0
        %690 = vmatpush1.msra.mxu0 0.0
        %691 = vmatprep.mubr.f32.mxu0 0.0
        %692 = vmatmul.mubr.f32.gmra.mrb[0].mxu0 %v625
        %v693 = vpop.f32.mrb[0].mxu0
        %v694 = vadd.f32 0.0, %v693
        %v695 = vpop.f32.mrb[0].mxu0
        %v696 = vadd.f32 0.0, %v695
        %697 = vdwg.mxu0
        %v698 = vadd.f32 %v598, %v694
        %v699 = vadd.f32 %v599, %v696
        %700 = vrot.lane.b32.xlu0 %v223, 127
        %v701 = vpop.permute.xlu0 %700
        %702 = vrot.lane.b32.xlu0 %v224, 127
        %v703 = vpop.permute.xlu0 %702
        %vm704 = vcmp.lt.s32.totalorder %v232, 127
        %v705 = vsel %vm704, %v701, %v703
        %v706 = vsel %vm704, %v703, %v701
        %s707 = scalar_lea.vmem %s3, 10
        %v708 = vld [vmem:[%s707] sm:$0x3]
        %v710 = vlaneseq
        %v711 = vshrl.u32 %v710, 7
        %v712 = vsub.s32 0, %v711
        %v713 = vrot.slane %v708, %v712
        %v714 = vlaneseq
        %v715 = vshrl.u32 %v714, 7
        %v716 = vsub.s32 1, %v715
        %v717 = vrot.slane %v708, %v716
        %v720 = vmul.f32 %v705, %v713
        %v721 = vmul.f32 %v706, %v717
        %s722 = scalar_lea.vmem %s1, 40
        %v723 = vld [vmem:[%s722] sm:$0xff]
        %v725 = vsel %vm251, %v723, 0
        %727 = vmatprep.subr.mxu0 %v721
        %728 = vmatpush1.msra.mxu0 %v720
        %729 = vmatprep.subr.mxu0 0.0
        %730 = vmatpush1.msra.mxu0 0.0
        %731 = vmatprep.subr.mxu0 0.0
        %732 = vmatpush1.msra.mxu0 0.0
        %733 = vmatprep.subr.mxu0 0.0
        %734 = vmatpush1.msra.mxu0 0.0
        %735 = vmatprep.subr.mxu0 0.0
        %736 = vmatpush1.msra.mxu0 0.0
        %737 = vmatprep.subr.mxu0 0.0
        %738 = vmatpush1.msra.mxu0 0.0
        %739 = vmatprep.subr.mxu0 0.0
        %740 = vmatpush1.msra.mxu0 0.0
        %741 = vmatprep.subr.mxu0 0.0
        %742 = vmatpush1.msra.mxu0 0.0
        %743 = vmatprep.subr.mxu0 0.0
        %744 = vmatpush1.msra.mxu0 0.0
        %745 = vmatprep.subr.mxu0 0.0
        %746 = vmatpush1.msra.mxu0 0.0
        %747 = vmatprep.subr.mxu0 0.0
        %748 = vmatpush1.msra.mxu0 0.0
        %749 = vmatprep.subr.mxu0 0.0
        %750 = vmatpush1.msra.mxu0 0.0
        %751 = vmatprep.subr.mxu0 0.0
        %752 = vmatpush1.msra.mxu0 0.0
        %753 = vmatprep.subr.mxu0 0.0
        %754 = vmatpush1.msra.mxu0 0.0
        %755 = vmatprep.subr.mxu0 0.0
        %756 = vmatpush1.msra.mxu0 0.0
        %757 = vmatprep.subr.mxu0 0.0
        %758 = vmatpush1.msra.mxu0 0.0
        %759 = vmatprep.subr.mxu0 0.0
        %760 = vmatpush1.msra.mxu0 0.0
        %761 = vmatprep.subr.mxu0 0.0
        %762 = vmatpush1.msra.mxu0 0.0
        %763 = vmatprep.subr.mxu0 0.0
        %764 = vmatpush1.msra.mxu0 0.0
        %765 = vmatprep.subr.mxu0 0.0
        %766 = vmatpush1.msra.mxu0 0.0
        %767 = vmatprep.subr.mxu0 0.0
        %768 = vmatpush1.msra.mxu0 0.0
        %769 = vmatprep.subr.mxu0 0.0
        %770 = vmatpush1.msra.mxu0 0.0
        %771 = vmatprep.subr.mxu0 0.0
        %772 = vmatpush1.msra.mxu0 0.0
        %773 = vmatprep.subr.mxu0 0.0
        %774 = vmatpush1.msra.mxu0 0.0
        %775 = vmatprep.subr.mxu0 0.0
        %776 = vmatpush1.msra.mxu0 0.0
        %777 = vmatprep.subr.mxu0 0.0
        %778 = vmatpush1.msra.mxu0 0.0
        %779 = vmatprep.subr.mxu0 0.0
        %780 = vmatpush1.msra.mxu0 0.0
        %781 = vmatprep.subr.mxu0 0.0
        %782 = vmatpush1.msra.mxu0 0.0
        %783 = vmatprep.subr.mxu0 0.0
        %784 = vmatpush1.msra.mxu0 0.0
        %785 = vmatprep.subr.mxu0 0.0
        %786 = vmatpush1.msra.mxu0 0.0
        %787 = vmatprep.subr.mxu0 0.0
        %788 = vmatpush1.msra.mxu0 0.0
        %789 = vmatprep.subr.mxu0 0.0
        %790 = vmatpush1.msra.mxu0 0.0
        %791 = vmatprep.mubr.f32.mxu0 0.0
        %792 = vmatmul.mubr.f32.gmra.mrb[0].mxu0 %v725
        %v793 = vpop.f32.mrb[0].mxu0
        %v794 = vadd.f32 0.0, %v793
        %v795 = vpop.f32.mrb[0].mxu0
        %v796 = vadd.f32 0.0, %v795
        %797 = vdwg.mxu0
        %v798 = vadd.f32 %v698, %v794
        %v799 = vadd.f32 %v699, %v796
        %800 = vrot.lane.b32.xlu0 %v223, 113
        %v801 = vpop.permute.xlu0 %800
        %802 = vrot.lane.b32.xlu0 %v224, 113
        %v803 = vpop.permute.xlu0 %802
        %vm804 = vcmp.lt.s32.totalorder %v232, 113
        %v805 = vsel %vm804, %v801, %v803
        %v806 = vsel %vm804, %v803, %v801
        %s807 = scalar_lea.vmem %s3, 12
        %v808 = vld [vmem:[%s807] sm:$0x3]
        %v810 = vlaneseq
        %v811 = vshrl.u32 %v810, 7
        %v812 = vsub.s32 0, %v811
        %v813 = vrot.slane %v808, %v812
        %v814 = vlaneseq
        %v815 = vshrl.u32 %v814, 7
        %v816 = vsub.s32 1, %v815
        %v817 = vrot.slane %v808, %v816
        %v820 = vmul.f32 %v805, %v813
        %v821 = vmul.f32 %v806, %v817
        %s822 = scalar_lea.vmem %s1, 48
        %v823 = vld [vmem:[%s822] sm:$0xff]
        %v825 = vsel %vm251, %v823, 0
        %827 = vmatprep.subr.mxu0 %v821
        %828 = vmatpush1.msra.mxu0 %v820
        %829 = vmatprep.subr.mxu0 0.0
        %830 = vmatpush1.msra.mxu0 0.0
        %831 = vmatprep.subr.mxu0 0.0
        %832 = vmatpush1.msra.mxu0 0.0
        %833 = vmatprep.subr.mxu0 0.0
        %834 = vmatpush1.msra.mxu0 0.0
        %835 = vmatprep.subr.mxu0 0.0
        %836 = vmatpush1.msra.mxu0 0.0
        %837 = vmatprep.subr.mxu0 0.0
        %838 = vmatpush1.msra.mxu0 0.0
        %839 = vmatprep.subr.mxu0 0.0
        %840 = vmatpush1.msra.mxu0 0.0
        %841 = vmatprep.subr.mxu0 0.0
        %842 = vmatpush1.msra.mxu0 0.0
        %843 = vmatprep.subr.mxu0 0.0
        %844 = vmatpush1.msra.mxu0 0.0
        %845 = vmatprep.subr.mxu0 0.0
        %846 = vmatpush1.msra.mxu0 0.0
        %847 = vmatprep.subr.mxu0 0.0
        %848 = vmatpush1.msra.mxu0 0.0
        %849 = vmatprep.subr.mxu0 0.0
        %850 = vmatpush1.msra.mxu0 0.0
        %851 = vmatprep.subr.mxu0 0.0
        %852 = vmatpush1.msra.mxu0 0.0
        %853 = vmatprep.subr.mxu0 0.0
        %854 = vmatpush1.msra.mxu0 0.0
        %855 = vmatprep.subr.mxu0 0.0
        %856 = vmatpush1.msra.mxu0 0.0
        %857 = vmatprep.subr.mxu0 0.0
        %858 = vmatpush1.msra.mxu0 0.0
        %859 = vmatprep.subr.mxu0 0.0
        %860 = vmatpush1.msra.mxu0 0.0
        %861 = vmatprep.subr.mxu0 0.0
        %862 = vmatpush1.msra.mxu0 0.0
        %863 = vmatprep.subr.mxu0 0.0
        %864 = vmatpush1.msra.mxu0 0.0
        %865 = vmatprep.subr.mxu0 0.0
        %866 = vmatpush1.msra.mxu0 0.0
        %867 = vmatprep.subr.mxu0 0.0
        %868 = vmatpush1.msra.mxu0 0.0
        %869 = vmatprep.subr.mxu0 0.0
        %870 = vmatpush1.msra.mxu0 0.0
        %871 = vmatprep.subr.mxu0 0.0
        %872 = vmatpush1.msra.mxu0 0.0
        %873 = vmatprep.subr.mxu0 0.0
        %874 = vmatpush1.msra.mxu0 0.0
        %875 = vmatprep.subr.mxu0 0.0
        %876 = vmatpush1.msra.mxu0 0.0
        %877 = vmatprep.subr.mxu0 0.0
        %878 = vmatpush1.msra.mxu0 0.0
        %879 = vmatprep.subr.mxu0 0.0
        %880 = vmatpush1.msra.mxu0 0.0
        %881 = vmatprep.subr.mxu0 0.0
        %882 = vmatpush1.msra.mxu0 0.0
        %883 = vmatprep.subr.mxu0 0.0
        %884 = vmatpush1.msra.mxu0 0.0
        %885 = vmatprep.subr.mxu0 0.0
        %886 = vmatpush1.msra.mxu0 0.0
        %887 = vmatprep.subr.mxu0 0.0
        %888 = vmatpush1.msra.mxu0 0.0
        %889 = vmatprep.subr.mxu0 0.0
        %890 = vmatpush1.msra.mxu0 0.0
        %891 = vmatprep.mubr.f32.mxu0 0.0
        %892 = vmatmul.mubr.f32.gmra.mrb[0].mxu0 %v825
        %v893 = vpop.f32.mrb[0].mxu0
        %v894 = vadd.f32 0.0, %v893
        %v895 = vpop.f32.mrb[0].mxu0
        %v896 = vadd.f32 0.0, %v895
        %897 = vdwg.mxu0
        %v898 = vadd.f32 %v798, %v894
        %v899 = vadd.f32 %v799, %v896
        %900 = vrot.lane.b32.xlu0 %v223, 112
        %v901 = vpop.permute.xlu0 %900
        %902 = vrot.lane.b32.xlu0 %v224, 112
        %v903 = vpop.permute.xlu0 %902
        %vm904 = vcmp.lt.s32.totalorder %v232, 112
        %v905 = vsel %vm904, %v901, %v903
        %v906 = vsel %vm904, %v903, %v901
        %s907 = scalar_lea.vmem %s3, 14
        %v908 = vld [vmem:[%s907] sm:$0x3]
        %v910 = vlaneseq
        %v911 = vshrl.u32 %v910, 7
        %v912 = vsub.s32 0, %v911
        %v913 = vrot.slane %v908, %v912
        %v914 = vlaneseq
        %v915 = vshrl.u32 %v914, 7
        %v916 = vsub.s32 1, %v915
        %v917 = vrot.slane %v908, %v916
        %v920 = vmul.f32 %v905, %v913
        %v921 = vmul.f32 %v906, %v917
        %s922 = scalar_lea.vmem %s1, 56
        %v923 = vld [vmem:[%s922] sm:$0xff]
        %v925 = vsel %vm251, %v923, 0
        %927 = vmatprep.subr.mxu0 %v921
        %928 = vmatpush1.msra.mxu0 %v920
        %929 = vmatprep.subr.mxu0 0.0
        %930 = vmatpush1.msra.mxu0 0.0
        %931 = vmatprep.subr.mxu0 0.0
        %932 = vmatpush1.msra.mxu0 0.0
        %933 = vmatprep.subr.mxu0 0.0
        %934 = vmatpush1.msra.mxu0 0.0
        %935 = vmatprep.subr.mxu0 0.0
        %936 = vmatpush1.msra.mxu0 0.0
        %937 = vmatprep.subr.mxu0 0.0
        %938 = vmatpush1.msra.mxu0 0.0
        %939 = vmatprep.subr.mxu0 0.0
        %940 = vmatpush1.msra.mxu0 0.0
        %941 = vmatprep.subr.mxu0 0.0
        %942 = vmatpush1.msra.mxu0 0.0
        %943 = vmatprep.subr.mxu0 0.0
        %944 = vmatpush1.msra.mxu0 0.0
        %945 = vmatprep.subr.mxu0 0.0
        %946 = vmatpush1.msra.mxu0 0.0
        %947 = vmatprep.subr.mxu0 0.0
        %948 = vmatpush1.msra.mxu0 0.0
        %949 = vmatprep.subr.mxu0 0.0
        %950 = vmatpush1.msra.mxu0 0.0
        %951 = vmatprep.subr.mxu0 0.0
        %952 = vmatpush1.msra.mxu0 0.0
        %953 = vmatprep.subr.mxu0 0.0
        %954 = vmatpush1.msra.mxu0 0.0
        %955 = vmatprep.subr.mxu0 0.0
        %956 = vmatpush1.msra.mxu0 0.0
        %957 = vmatprep.subr.mxu0 0.0
        %958 = vmatpush1.msra.mxu0 0.0
        %959 = vmatprep.subr.mxu0 0.0
        %960 = vmatpush1.msra.mxu0 0.0
        %961 = vmatprep.subr.mxu0 0.0
        %962 = vmatpush1.msra.mxu0 0.0
        %963 = vmatprep.subr.mxu0 0.0
        %964 = vmatpush1.msra.mxu0 0.0
        %965 = vmatprep.subr.mxu0 0.0
        %966 = vmatpush1.msra.mxu0 0.0
        %967 = vmatprep.subr.mxu0 0.0
        %968 = vmatpush1.msra.mxu0 0.0
        %969 = vmatprep.subr.mxu0 0.0
        %970 = vmatpush1.msra.mxu0 0.0
        %971 = vmatprep.subr.mxu0 0.0
        %972 = vmatpush1.msra.mxu0 0.0
        %973 = vmatprep.subr.mxu0 0.0
        %974 = vmatpush1.msra.mxu0 0.0
        %975 = vmatprep.subr.mxu0 0.0
        %976 = vmatpush1.msra.mxu0 0.0
        %977 = vmatprep.subr.mxu0 0.0
        %978 = vmatpush1.msra.mxu0 0.0
        %979 = vmatprep.subr.mxu0 0.0
        %980 = vmatpush1.msra.mxu0 0.0
        %981 = vmatprep.subr.mxu0 0.0
        %982 = vmatpush1.msra.mxu0 0.0
        %983 = vmatprep.subr.mxu0 0.0
        %984 = vmatpush1.msra.mxu0 0.0
        %985 = vmatprep.subr.mxu0 0.0
        %986 = vmatpush1.msra.mxu0 0.0
        %987 = vmatprep.subr.mxu0 0.0
        %988 = vmatpush1.msra.mxu0 0.0
        %989 = vmatprep.subr.mxu0 0.0
        %990 = vmatpush1.msra.mxu0 0.0
        %991 = vmatprep.mubr.f32.mxu0 0.0
        %992 = vmatmul.mubr.f32.gmra.mrb[0].mxu0 %v925
        %v993 = vpop.f32.mrb[0].mxu0
        %v994 = vadd.f32 0.0, %v993
        %v995 = vpop.f32.mrb[0].mxu0
        %v996 = vadd.f32 0.0, %v995
        %997 = vdwg.mxu0
        %v998 = vadd.f32 %v898, %v994
        %v999 = vadd.f32 %v899, %v996
        %1000 = vrot.lane.b32.xlu0 %v223, 111
        %v1001 = vpop.permute.xlu0 %1000
        %1002 = vrot.lane.b32.xlu0 %v224, 111
        %v1003 = vpop.permute.xlu0 %1002
        %vm1004 = vcmp.lt.s32.totalorder %v232, 111
        %v1005 = vsel %vm1004, %v1001, %v1003
        %v1006 = vsel %vm1004, %v1003, %v1001
        %s1007 = scalar_lea.vmem %s3, 16
        %v1008 = vld [vmem:[%s1007] sm:$0x3]
        %v1010 = vlaneseq
        %v1011 = vshrl.u32 %v1010, 7
        %v1012 = vsub.s32 0, %v1011
        %v1013 = vrot.slane %v1008, %v1012
        %v1014 = vlaneseq
        %v1015 = vshrl.u32 %v1014, 7
        %v1016 = vsub.s32 1, %v1015
        %v1017 = vrot.slane %v1008, %v1016
        %v1020 = vmul.f32 %v1005, %v1013
        %v1021 = vmul.f32 %v1006, %v1017
        %s1022 = scalar_lea.vmem %s1, 64
        %v1023 = vld [vmem:[%s1022] sm:$0xff]
        %v1025 = vsel %vm251, %v1023, 0
        %1027 = vmatprep.subr.mxu0 %v1021
        %1028 = vmatpush1.msra.mxu0 %v1020
        %1029 = vmatprep.subr.mxu0 0.0
        %1030 = vmatpush1.msra.mxu0 0.0
        %1031 = vmatprep.subr.mxu0 0.0
        %1032 = vmatpush1.msra.mxu0 0.0
        %1033 = vmatprep.subr.mxu0 0.0
        %1034 = vmatpush1.msra.mxu0 0.0
        %1035 = vmatprep.subr.mxu0 0.0
        %1036 = vmatpush1.msra.mxu0 0.0
        %1037 = vmatprep.subr.mxu0 0.0
        %1038 = vmatpush1.msra.mxu0 0.0
        %1039 = vmatprep.subr.mxu0 0.0
        %1040 = vmatpush1.msra.mxu0 0.0
        %1041 = vmatprep.subr.mxu0 0.0
        %1042 = vmatpush1.msra.mxu0 0.0
        %1043 = vmatprep.subr.mxu0 0.0
        %1044 = vmatpush1.msra.mxu0 0.0
        %1045 = vmatprep.subr.mxu0 0.0
        %1046 = vmatpush1.msra.mxu0 0.0
        %1047 = vmatprep.subr.mxu0 0.0
        %1048 = vmatpush1.msra.mxu0 0.0
        %1049 = vmatprep.subr.mxu0 0.0
        %1050 = vmatpush1.msra.mxu0 0.0
        %1051 = vmatprep.subr.mxu0 0.0
        %1052 = vmatpush1.msra.mxu0 0.0
        %1053 = vmatprep.subr.mxu0 0.0
        %1054 = vmatpush1.msra.mxu0 0.0
        %1055 = vmatprep.subr.mxu0 0.0
        %1056 = vmatpush1.msra.mxu0 0.0
        %1057 = vmatprep.subr.mxu0 0.0
        %1058 = vmatpush1.msra.mxu0 0.0
        %1059 = vmatprep.subr.mxu0 0.0
        %1060 = vmatpush1.msra.mxu0 0.0
        %1061 = vmatprep.subr.mxu0 0.0
        %1062 = vmatpush1.msra.mxu0 0.0
        %1063 = vmatprep.subr.mxu0 0.0
        %1064 = vmatpush1.msra.mxu0 0.0
        %1065 = vmatprep.subr.mxu0 0.0
        %1066 = vmatpush1.msra.mxu0 0.0
        %1067 = vmatprep.subr.mxu0 0.0
        %1068 = vmatpush1.msra.mxu0 0.0
        %1069 = vmatprep.subr.mxu0 0.0
        %1070 = vmatpush1.msra.mxu0 0.0
        %1071 = vmatprep.subr.mxu0 0.0
        %1072 = vmatpush1.msra.mxu0 0.0
        %1073 = vmatprep.subr.mxu0 0.0
        %1074 = vmatpush1.msra.mxu0 0.0
        %1075 = vmatprep.subr.mxu0 0.0
        %1076 = vmatpush1.msra.mxu0 0.0
        %1077 = vmatprep.subr.mxu0 0.0
        %1078 = vmatpush1.msra.mxu0 0.0
        %1079 = vmatprep.subr.mxu0 0.0
        %1080 = vmatpush1.msra.mxu0 0.0
        %1081 = vmatprep.subr.mxu0 0.0
        %1082 = vmatpush1.msra.mxu0 0.0
        %1083 = vmatprep.subr.mxu0 0.0
        %1084 = vmatpush1.msra.mxu0 0.0
        %1085 = vmatprep.subr.mxu0 0.0
        %1086 = vmatpush1.msra.mxu0 0.0
        %1087 = vmatprep.subr.mxu0 0.0
        %1088 = vmatpush1.msra.mxu0 0.0
        %1089 = vmatprep.subr.mxu0 0.0
        %1090 = vmatpush1.msra.mxu0 0.0
        %1091 = vmatprep.mubr.f32.mxu0 0.0
        %1092 = vmatmul.mubr.f32.gmra.mrb[0].mxu0 %v1025
        %v1093 = vpop.f32.mrb[0].mxu0
        %v1094 = vadd.f32 0.0, %v1093
        %v1095 = vpop.f32.mrb[0].mxu0
        %v1096 = vadd.f32 0.0, %v1095
        %1097 = vdwg.mxu0
        %v1098 = vadd.f32 %v998, %v1094
        %v1099 = vadd.f32 %v999, %v1096
        %v1100 = vld [vmem:[%s2] sm:$0xff]
        %1102 = vset.pattern.permute.xlu0 0
        %1103 = vperm.xlu0 %1102, %v1100
        %v1104 = vpop.permute.xlu0 %1103
        %v1106 = vadd.f32 %v1098, %v1104
        %v1107 = vadd.f32 %v1099, %v1104
        %1108 = vset.pattern.permute.xlu0 1
        %1109 = vperm.xlu0 %1108, %v1100
        %v1110 = vpop.permute.xlu0 %1109
        %v1112 = vmul.f32 %v223, %v1110
        %v1113 = vmul.f32 %v224, %v1110
        %1114 = vset.pattern.permute.xlu0 2
        %1115 = vperm.xlu0 %1114, %v1100
        %v1116 = vpop.permute.xlu0 %1115
        %v1118 = vadd.f32 %v1112, %v1116
        %v1119 = vadd.f32 %v1113, %v1116
        %v1120 = vadd.f32 %v1118, %v1119
        %1121 = vadd.xlane.f32.xlu0 %v1120
        %v1122 = vpop.xlane.xlu0 %1121
        %v1123 = vmul.f32 %v1122, 0.00390625
        %v1124 = vld [vmem:[%s4] sm:$0xff]
        %1125 = vrot.lane.b32.xlu0 %v1100, 125
        %v1126 = vpop.permute.xlu0 %1125
        %v1129 = vsel %vm251, %v1124, 0
        %1131 = vmatprep.subr.mxu0 0.0
        %1132 = vmatpush1.msra.mxu0 %v1123
        %1133 = vmatprep.subr.mxu0 0.0
        %1134 = vmatpush1.msra.mxu0 0.0
        %1135 = vmatprep.subr.mxu0 0.0
        %1136 = vmatpush1.msra.mxu0 0.0
        %1137 = vmatprep.subr.mxu0 0.0
        %1138 = vmatpush1.msra.mxu0 0.0
        %1139 = vmatprep.subr.mxu0 0.0
        %1140 = vmatpush1.msra.mxu0 0.0
        %1141 = vmatprep.subr.mxu0 0.0
        %1142 = vmatpush1.msra.mxu0 0.0
        %1143 = vmatprep.subr.mxu0 0.0
        %1144 = vmatpush1.msra.mxu0 0.0
        %1145 = vmatprep.subr.mxu0 0.0
        %1146 = vmatpush1.msra.mxu0 0.0
        %1147 = vmatprep.subr.mxu0 0.0
        %1148 = vmatpush1.msra.mxu0 0.0
        %1149 = vmatprep.subr.mxu0 0.0
        %1150 = vmatpush1.msra.mxu0 0.0
        %1151 = vmatprep.subr.mxu0 0.0
        %1152 = vmatpush1.msra.mxu0 0.0
        %1153 = vmatprep.subr.mxu0 0.0
        %1154 = vmatpush1.msra.mxu0 0.0
        %1155 = vmatprep.subr.mxu0 0.0
        %1156 = vmatpush1.msra.mxu0 0.0
        %1157 = vmatprep.subr.mxu0 0.0
        %1158 = vmatpush1.msra.mxu0 0.0
        %1159 = vmatprep.subr.mxu0 0.0
        %1160 = vmatpush1.msra.mxu0 0.0
        %1161 = vmatprep.subr.mxu0 0.0
        %1162 = vmatpush1.msra.mxu0 0.0
        %1163 = vmatprep.subr.mxu0 0.0
        %1164 = vmatpush1.msra.mxu0 0.0
        %1165 = vmatprep.subr.mxu0 0.0
        %1166 = vmatpush1.msra.mxu0 0.0
        %1167 = vmatprep.subr.mxu0 0.0
        %1168 = vmatpush1.msra.mxu0 0.0
        %1169 = vmatprep.subr.mxu0 0.0
        %1170 = vmatpush1.msra.mxu0 0.0
        %1171 = vmatprep.subr.mxu0 0.0
        %1172 = vmatpush1.msra.mxu0 0.0
        %1173 = vmatprep.subr.mxu0 0.0
        %1174 = vmatpush1.msra.mxu0 0.0
        %1175 = vmatprep.subr.mxu0 0.0
        %1176 = vmatpush1.msra.mxu0 0.0
        %1177 = vmatprep.subr.mxu0 0.0
        %1178 = vmatpush1.msra.mxu0 0.0
        %1179 = vmatprep.subr.mxu0 0.0
        %1180 = vmatpush1.msra.mxu0 0.0
        %1181 = vmatprep.subr.mxu0 0.0
        %1182 = vmatpush1.msra.mxu0 0.0
        %1183 = vmatprep.subr.mxu0 0.0
        %1184 = vmatpush1.msra.mxu0 0.0
        %1185 = vmatprep.subr.mxu0 0.0
        %1186 = vmatpush1.msra.mxu0 0.0
        %1187 = vmatprep.subr.mxu0 0.0
        %1188 = vmatpush1.msra.mxu0 0.0
        %1189 = vmatprep.subr.mxu0 0.0
        %1190 = vmatpush1.msra.mxu0 0.0
        %1191 = vmatprep.subr.mxu0 0.0
        %1192 = vmatpush1.msra.mxu0 0.0
        %1193 = vmatprep.subr.mxu0 0.0
        %1194 = vmatpush1.msra.mxu0 0.0
        %1195 = vmatprep.mubr.f32.mxu0 0.0
        %1196 = vmatmul.mubr.f32.gmra.mrb[0].mxu0 %v1129
        %v1197 = vpop.f32.mrb[0].mxu0
        %v1198 = vadd.f32 %v1126, %v1197
        %v1199 = vpop.f32.mrb[0].mxu0
        %1200 = vdwg.mxu0
        %v1201 = vxor.u32 %v1198, 2147483648
        %v1202 = vmul.f32 %v1201, 1.442695
        %v1203 = vpow.pop %v1202
        %v1204 = vadd.f32 %v1203, 1.0
        %v1205 = vrcp.pop %v1204
        %v1206 = vmul.f32 1.0, %v1205
        %1208 = vset.pattern.permute.xlu0 0
        %1209 = vperm.xlu0 %1208, %v1206
        %v1210 = vpop.permute.xlu0 %1209
        %v1212 = vmul.f32 %v1118, %v1210
        %v1213 = vmul.f32 %v1119, %v1210
        %v1214 = vadd.f32 %v1106, %v1212
        %v1215 = vadd.f32 %v1107, %v1213
        %1216 = vst [vmem:[%s217] sm:$0xff] %v1214
        %1217 = vst [vmem:[%s217 + $0x8] sm:$0xff] %v1215
        %s1218 = sand.u32 %s137, 1
        %s1219 = scalar_lea.sflag [#allocation3], %s1218
        %s1220 = sand.u32 %s137, 1
        %s1221 = smul.addr %s1220, 16
        %s1222 = scalar_lea.vmem [#allocation2], %s1221
        // Predicated region
        $region41: #{tpu_custom_call.1} parent=39 // pred_check
          %p1223 = pneg %p147
        $region42: #{tpu_custom_call.1} parent=39 // pred_check_branch
          %1225 = sbr.rel (%p1223) target = $region44
        $region43: #{tpu_custom_call.1} parent=39 // pred_region
          %s1227 = ssub.s32 256, 256
          %1228 = vsyncadd %s1219, %s1227
          %s1229 = smul.addr %s19, 2
          %s1230 = smul.addr %s1229, 128
          %s1231 = scalar_lea.hbm %s5, %s1230
          %s1233 = sshll.u32 %s1222, 4
          %s1234 = int_to_ptr.vmem [resolvable:$true] %s1233
          %1236 = dma.vmem_to_hbm [thread:$0]  %s1234, 256, %s1231, %s1219
        $region44: #{tpu_custom_call.1} parent=39 // pred_fallthru
          _
      $region40: #{tpu_custom_call.1} parent=5 // pred_fallthru
        _
      %p1237 = scmp.le.s32.totalorder 2, %s14
      // Predicated region
      $region45: #{tpu_custom_call.1} parent=5 // pred_check
        %p1238 = pneg %p1237
      $region46: #{tpu_custom_call.1} parent=5 // pred_check_branch
        %1240 = sbr.rel (%p1238) target = $region48
      $region47: #{tpu_custom_call.1} parent=5 // pred_region
        %s1241 = ssub.s32 %s14, 2
        // Predicated region
        $region49: #{tpu_custom_call.1} parent=47 // pred_check
          %p1242 = pneg %p153
        $region50: #{tpu_custom_call.1} parent=47 // pred_check_branch
          %1244 = sbr.rel (%p1242) target = $region52
        $region51: #{tpu_custom_call.1} parent=47 // pred_region
          %s1245 = sand.u32 %s138, 1
          %s1246 = scalar_lea.sflag [#allocation3], %s1245
          %s1247 = sand.u32 %s138, 1
          %s1248 = smul.addr %s1247, 16
          %s1249 = scalar_lea.vmem [#allocation2], %s1248
          %1250 = dma.done %s1246, 256
        $region52: #{tpu_custom_call.1} parent=47 // pred_fallthru
          _
      $region48: #{tpu_custom_call.1} parent=5 // pred_fallthru
        _
    $region6: #{tpu_custom_call.1} parent=1 // loop_footer
      %s18 = sadd.s32 1, %s14
    $region7: #{tpu_custom_call.1} parent=1 // loop_footer_branch
      %13 = sbr.rel target = $region3
    $region8: #{tpu_custom_call.1} parent=1 // loop_exit
      _
    %1251 = vsyncpa [#allocation3], 1
    %s1252 = scalar_lea.sflag [#allocation3], 1
    %1253 = vsyncpa %s1252, 1

</llo_original>
